<compile_context>
chip_gen: v7x
topology: tpu7x:2x2x1
jax: 0.10.0
libtpu: 0.0.40
codegen_flags: <defaults>
</compile_context>

<pallas_src>
import jax
import jax.numpy as jnp
from jax.experimental import pallas as pl
from jax.experimental.pallas import tpu as pltpu

C_IN = 256        # per-stream input channels
C_ATT = 128       # attention-stream hidden channels (folded away)
C_HID = 128       # conv1 output channels
NUM_CLASS = 7     # conv2 output channels
ATT_PAD = 8       # attention column + zero padding rows appended to conv1 weight


def _fusion_kernel(
    att_const_ref,                 # SMEM (2,)   : [const_f, const_c]
    face_ref, ctx_ref,             # VMEM (1, 256, TL) f32
    wfT_ref, wcT_ref,              # VMEM (136, 256) bf16  (rows 0..127 = conv1 half, row 128 = folded attention)
    b1_ref,                        # VMEM (128, 1) f32
    w2T_ref,                       # VMEM (7, 128) bf16
    b2_ref,                        # VMEM (7, 1) f32
    out_ref,                       # VMEM (1, 7, TL) f32
):
    f = face_ref[0].astype(jnp.bfloat16)     # (256, TL)
    c = ctx_ref[0].astype(jnp.bfloat16)      # (256, TL)

    # One MXU pass per stream produces both the conv1 half-result and the
    # (folded) attention logit.
    rf = jnp.dot(wfT_ref[...], f, preferred_element_type=jnp.float32)   # (136, TL)
    rc = jnp.dot(wcT_ref[...], c, preferred_element_type=jnp.float32)   # (136, TL)

    hf = rf[:C_HID, :]                                   # (128, TL)  f @ w1f   (unscaled)
    hc = rc[:C_HID, :]                                   # (128, TL)  c @ w1c   (unscaled)
    fw = rf[C_HID:C_HID + 1, :] + att_const_ref[0]       # (1, TL)    face attention logit
    cw = rc[C_HID:C_HID + 1, :] + att_const_ref[1]       # (1, TL)    context attention logit

    # 2-way softmax over the attention logits (numerically stabilized, f32).
    m = jnp.maximum(fw, cw)
    ef = jnp.exp(fw - m)
    ec = jnp.exp(cw - m)
    inv = pl.reciprocal(ef + ec, approx=True)            # EUP; denominator >= 1
    att_f = ef * inv
    att_c = ec * inv

    # Scale-after-matmul (identical math: attention weights are per-pixel scalars).
    h = jnp.maximum(att_f * hf + att_c * hc + b1_ref[...], 0.0)         # (128, TL)

    # TODO(synk): Dropout2d is identity in eval mode; training-mode channel dropout not implemented.
    out = jnp.dot(w2T_ref[...], h.astype(jnp.bfloat16),
                  preferred_element_type=jnp.float32) + b2_ref[...]      # (7, TL)
    out_ref[0] = out.astype(out_ref.dtype)


def fold_params(params):
    """Fold the linear attention streams and repack weights for the kernel."""
    (wf1, bf1, wf2, bf2, wc1, bc1, wc2, bc2, w1f, w1c, b1, w2, b2) = params

    # attention streams: (x @ wf1 + bf1) @ wf2 + bf2  ==  x @ (wf1 @ wf2) + const
    vf = wf1 @ wf2                                   # (256, 1)
    vc = wc1 @ wc2                                   # (256, 1)
    const_f = (bf1 @ wf2 + bf2).reshape(())          # scalar
    const_c = (bc1 @ wc2 + bc2).reshape(())          # scalar
    att_const = jnp.stack([const_f, const_c]).astype(jnp.float32)        # (2,)

    # channels-first weights (rows = output channels); attention column appended.
    zpad = jnp.zeros((ATT_PAD - 1, C_IN), jnp.float32)
    wfT = jnp.concatenate([w1f.T, vf.T, zpad], axis=0).astype(jnp.bfloat16)   # (136, 256)
    wcT = jnp.concatenate([w1c.T, vc.T, zpad], axis=0).astype(jnp.bfloat16)   # (136, 256)
    w2T = w2.T.astype(jnp.bfloat16)                                           # (7, 128)
    b1c = b1.reshape(C_HID, 1).astype(jnp.float32)                            # (128, 1)
    b2c = b2.reshape(NUM_CLASS, 1).astype(jnp.float32)                        # (7, 1)
    return att_const, wfT, wcT, b1c, w2T, b2c


def fusion_network_pallas(face_nchw, ctx_nchw, folded_params, *, tile_l=512):
    """face/ctx: (N, 256, H, W) float32.  Returns (N, NUM_CLASS, H, W) float32."""
    assert tile_l % 128 == 0
    N, C, H, W = face_nchw.shape
    assert C == C_IN and ctx_nchw.shape == face_nchw.shape
    L = H * W

    # Free reshapes (merge trailing spatial dims) -- no HBM round trips.
    face3 = face_nchw.reshape(N, C_IN, L)
    ctx3 = ctx_nchw.reshape(N, C_IN, L)

    tl = min(tile_l, L)                 # block == full dim if L is small
    grid_l = pl.cdiv(L, tl)             # ragged last block is masked by Pallas

    att_const, wfT, wcT, b1c, w2T, b2c = folded_params

    full = lambda shp: pl.BlockSpec(shp, lambda n, l: (0, 0))
    out3 = pl.pallas_call(
        _fusion_kernel,
        out_shape=jax.ShapeDtypeStruct((N, NUM_CLASS, L), jnp.float32),
        grid=(N, grid_l),
        in_specs=[
            pl.BlockSpec(memory_space=pltpu.MemorySpace.SMEM),          # att_const
            pl.BlockSpec((1, C_IN, tl), lambda n, l: (n, 0, l)),        # face
            pl.BlockSpec((1, C_IN, tl), lambda n, l: (n, 0, l)),        # context
            full(wfT.shape), full(wcT.shape),
            full(b1c.shape), full(w2T.shape), full(b2c.shape),
        ],
        out_specs=pl.BlockSpec((1, NUM_CLASS, tl), lambda n, l: (n, 0, l)),
        compiler_params=pltpu.CompilerParams(
            dimension_semantics=("parallel", "parallel")),
    )(att_const, face3, ctx3, wfT, wcT, b1c, w2T, b2c)

    return out3.reshape(N, NUM_CLASS, H, W)


def fusion_network_ref(face_nchw, ctx_nchw, params):
    """Pure-JAX f32 reference mirroring the PyTorch forward (eval mode)."""
    (wf1, bf1, wf2, bf2, wc1, bc1, wc2, bc2, w1f, w1c, b1, w2, b2) = params
    N, C, H, W = face_nchw.shape
    f = jnp.transpose(face_nchw, (0, 2, 3, 1)).reshape(-1, C_IN)
    c = jnp.transpose(ctx_nchw, (0, 2, 3, 1)).reshape(-1, C_IN)
    fw = (f @ wf1 + bf1) @ wf2 + bf2
    cw = (c @ wc1 + bc1) @ wc2 + bc2
    att = jax.nn.softmax(jnp.concatenate([fw, cw], axis=-1), axis=-1)
    f_s = f * att[:, 0:1]
    c_s = c * att[:, 1:2]
    h = jax.nn.relu(f_s @ w1f + c_s @ w1c + b1)
    out = h @ w2 + b2
    out = out.reshape(N, H, W, NUM_CLASS)
    return jnp.transpose(out, (0, 3, 1, 2))


def init_params(key):
    """Deterministic synthetic parameters (shapes match the PyTorch module)."""
    ks = jax.random.split(key, 13)
    s = 0.05
    wf1 = s * jax.random.normal(ks[0], (C_IN, C_ATT), jnp.float32)
    bf1 = s * jax.random.normal(ks[1], (1, C_ATT), jnp.float32)
    wf2 = s * jax.random.normal(ks[2], (C_ATT, 1), jnp.float32)
    bf2 = s * jax.random.normal(ks[3], (1, 1), jnp.float32)
    wc1 = s * jax.random.normal(ks[4], (C_IN, C_ATT), jnp.float32)
    bc1 = s * jax.random.normal(ks[5], (1, C_ATT), jnp.float32)
    wc2 = s * jax.random.normal(ks[6], (C_ATT, 1), jnp.float32)
    bc2 = s * jax.random.normal(ks[7], (1, 1), jnp.float32)
    # conv1: torch weight (128, 512, 1, 1) -> (512, 128), split into the face
    # half (first 256 input channels) and the context half (last 256).
    w1f = s * jax.random.normal(ks[8], (C_IN, C_HID), jnp.float32)
    w1c = s * jax.random.normal(ks[9], (C_IN, C_HID), jnp.float32)
    b1 = s * jax.random.normal(ks[10], (1, C_HID), jnp.float32)
    # conv2: torch weight (7, 128, 1, 1) -> (128, 7)
    w2 = s * jax.random.normal(ks[11], (C_HID, NUM_CLASS), jnp.float32)
    b2 = s * jax.random.normal(ks[12], (1, NUM_CLASS), jnp.float32)
    return (wf1, bf1, wf2, bf2, wc1, bc1, wc2, bc2, w1f, w1c, b1, w2, b2)


if __name__ == "__main__":
    key = jax.random.PRNGKey(0)
    k_face, k_ctx, k_par = jax.random.split(key, 3)

    N, H, W = 2, 16, 16   # small backbone feature map
    face = jax.random.normal(k_face, (N, C_IN, H, W), jnp.float32)
    ctx = jax.random.normal(k_ctx, (N, C_IN, H, W), jnp.float32)
    params = init_params(k_par)
    folded = fold_params(params)

    out = fusion_network_pallas(face, ctx, folded)
    out = jax.block_until_ready(out)

    ref = fusion_network_ref(face, ctx, params)
    assert out.shape == (N, NUM_CLASS, H, W), out.shape
    # bf16 matmuls + approx reciprocal: expect ~1e-3 level diffs vs f32 ref.
    err = float(jnp.max(jnp.abs(out - ref)))
    assert err < 2e-2, err

    print("KERNEL_OK")
</pallas_src>

<mosaic_0001>
module attributes {stable_mosaic.version = 11 : i64} {
  func.func @_fusion_kernel(%arg0: i32, %arg1: i32, %arg2: memref<2xf32, #tpu.memory_space<smem>>, %arg3: memref<1x256x256xf32, #tpu.memory_space<vmem>>, %arg4: memref<1x256x256xf32, #tpu.memory_space<vmem>>, %arg5: memref<136x256xbf16, #tpu.memory_space<vmem>>, %arg6: memref<136x256xbf16, #tpu.memory_space<vmem>>, %arg7: memref<128x1xf32, #tpu.memory_space<vmem>>, %arg8: memref<7x128xbf16, #tpu.memory_space<vmem>>, %arg9: memref<7x1xf32, #tpu.memory_space<vmem>>, %arg10: memref<1x7x256xf32, #tpu.memory_space<vmem>>) attributes {dimension_semantics = [#tpu.dimension_semantics<parallel>, #tpu.dimension_semantics<parallel>], iteration_bounds = array<i64: 2, 1>, scalar_prefetch = 0 : i64, scratch_operands = 0 : i64, tpu.core_type = #tpu.core_type<tc>, window_params = [{transform_indices = @transform_0, window_bounds = array<i64: 2>}, {transform_indices = @transform_1, window_bounds = array<i64: 1, 256, 256>}, {transform_indices = @transform_2, window_bounds = array<i64: 1, 256, 256>}, {pipeline_mode = #tpu.pipeline_mode<synchronous>, transform_indices = @transform_3, window_bounds = array<i64: 136, 256>}, {pipeline_mode = #tpu.pipeline_mode<synchronous>, transform_indices = @transform_4, window_bounds = array<i64: 136, 256>}, {pipeline_mode = #tpu.pipeline_mode<synchronous>, transform_indices = @transform_5, window_bounds = array<i64: 128, 1>}, {pipeline_mode = #tpu.pipeline_mode<synchronous>, transform_indices = @transform_6, window_bounds = array<i64: 7, 128>}, {pipeline_mode = #tpu.pipeline_mode<synchronous>, transform_indices = @transform_7, window_bounds = array<i64: 7, 1>}, {transform_indices = @transform_8, window_bounds = array<i64: 1, 7, 256>}]} {
    %c0 = arith.constant 0 : index
    %c0_0 = arith.constant 0 : index
    %c0_1 = arith.constant 0 : index
    %0 = vector.load %arg3[%c0, %c0_0, %c0_1] : memref<1x256x256xf32, #tpu.memory_space<vmem>>, vector<1x256x256xf32>
    %1 = vector.shape_cast %0 : vector<1x256x256xf32> to vector<256x256xf32>
    %2 = arith.truncf %1 : vector<256x256xf32> to vector<256x256xbf16>
    %c0_2 = arith.constant 0 : index
    %c0_3 = arith.constant 0 : index
    %c0_4 = arith.constant 0 : index
    %3 = vector.load %arg4[%c0_2, %c0_3, %c0_4] : memref<1x256x256xf32, #tpu.memory_space<vmem>>, vector<1x256x256xf32>
    %4 = vector.shape_cast %3 : vector<1x256x256xf32> to vector<256x256xf32>
    %5 = arith.truncf %4 : vector<256x256xf32> to vector<256x256xbf16>
    %c0_5 = arith.constant 0 : index
    %c0_6 = arith.constant 0 : index
    %6 = vector.load %arg5[%c0_5, %c0_6] : memref<136x256xbf16, #tpu.memory_space<vmem>>, vector<136x256xbf16>
    %cst = arith.constant dense<0.000000e+00> : vector<136x256xf32>
    %7 = tpu.matmul %6, %2, %cst {dimension_numbers = #tpu.dot_dimension_numbers<[1], [0], [0], [1], [0, 0, 1, 1], [], []>} : vector<136x256xbf16>, vector<256x256xbf16>, vector<136x256xf32> -> vector<136x256xf32>
    %c0_7 = arith.constant 0 : index
    %c0_8 = arith.constant 0 : index
    %8 = vector.load %arg6[%c0_7, %c0_8] : memref<136x256xbf16, #tpu.memory_space<vmem>>, vector<136x256xbf16>
    %cst_9 = arith.constant dense<0.000000e+00> : vector<136x256xf32>
    %9 = tpu.matmul %8, %5, %cst_9 {dimension_numbers = #tpu.dot_dimension_numbers<[1], [0], [0], [1], [0, 0, 1, 1], [], []>} : vector<136x256xbf16>, vector<256x256xbf16>, vector<136x256xf32> -> vector<136x256xf32>
    %10 = vector.extract_strided_slice %7 {offsets = [0, 0], sizes = [128, 256], strides = [1, 1]} : vector<136x256xf32> to vector<128x256xf32>
    %11 = vector.extract_strided_slice %9 {offsets = [0, 0], sizes = [128, 256], strides = [1, 1]} : vector<136x256xf32> to vector<128x256xf32>
    %12 = vector.extract_strided_slice %7 {offsets = [128, 0], sizes = [1, 256], strides = [1, 1]} : vector<136x256xf32> to vector<1x256xf32>
    %c0_10 = arith.constant 0 : index
    %13 = memref.load %arg2[%c0_10] : memref<2xf32, #tpu.memory_space<smem>>
    %14 = vector.broadcast %13 : f32 to vector<1x256xf32>
    %15 = arith.addf %12, %14 : vector<1x256xf32>
    %16 = vector.extract_strided_slice %9 {offsets = [128, 0], sizes = [1, 256], strides = [1, 1]} : vector<136x256xf32> to vector<1x256xf32>
    %c1 = arith.constant 1 : index
    %17 = memref.load %arg2[%c1] : memref<2xf32, #tpu.memory_space<smem>>
    %18 = vector.broadcast %17 : f32 to vector<1x256xf32>
    %19 = arith.addf %16, %18 : vector<1x256xf32>
    %20 = arith.maximumf %15, %19 : vector<1x256xf32>
    %21 = arith.subf %15, %20 : vector<1x256xf32>
    %22 = math.exp %21 : vector<1x256xf32>
    %23 = arith.subf %19, %20 : vector<1x256xf32>
    %24 = math.exp %23 : vector<1x256xf32>
    %25 = arith.addf %22, %24 : vector<1x256xf32>
    %26 = tpu.reciprocal %25 {approx = true} : vector<1x256xf32> -> vector<1x256xf32>
    %27 = arith.mulf %22, %26 : vector<1x256xf32>
    %28 = arith.mulf %24, %26 : vector<1x256xf32>
    %29 = vector.broadcast %27 : vector<1x256xf32> to vector<128x256xf32>
    %30 = arith.mulf %29, %10 : vector<128x256xf32>
    %31 = vector.broadcast %28 : vector<1x256xf32> to vector<128x256xf32>
    %32 = arith.mulf %31, %11 : vector<128x256xf32>
    %33 = arith.addf %30, %32 : vector<128x256xf32>
    %c0_11 = arith.constant 0 : index
    %c0_12 = arith.constant 0 : index
    %34 = vector.load %arg7[%c0_11, %c0_12] : memref<128x1xf32, #tpu.memory_space<vmem>>, vector<128x1xf32>
    %35 = vector.broadcast %34 : vector<128x1xf32> to vector<128x256xf32>
    %36 = arith.addf %33, %35 : vector<128x256xf32>
    %cst_13 = arith.constant 0.000000e+00 : f32
    %37 = vector.broadcast %cst_13 : f32 to vector<128x256xf32>
    %38 = arith.maximumf %36, %37 : vector<128x256xf32>
    %c0_14 = arith.constant 0 : index
    %c0_15 = arith.constant 0 : index
    %39 = vector.load %arg8[%c0_14, %c0_15] : memref<7x128xbf16, #tpu.memory_space<vmem>>, vector<7x128xbf16>
    %40 = arith.truncf %38 : vector<128x256xf32> to vector<128x256xbf16>
    %cst_16 = arith.constant dense<0.000000e+00> : vector<7x256xf32>
    %41 = tpu.matmul %39, %40, %cst_16 {dimension_numbers = #tpu.dot_dimension_numbers<[1], [0], [0], [1], [0, 0, 1, 1], [], []>} : vector<7x128xbf16>, vector<128x256xbf16>, vector<7x256xf32> -> vector<7x256xf32>
    %c0_17 = arith.constant 0 : index
    %c0_18 = arith.constant 0 : index
    %42 = vector.load %arg9[%c0_17, %c0_18] : memref<7x1xf32, #tpu.memory_space<vmem>>, vector<7x1xf32>
    %43 = vector.broadcast %42 : vector<7x1xf32> to vector<7x256xf32>
    %44 = arith.addf %41, %43 : vector<7x256xf32>
    %c0_19 = arith.constant 0 : index
    %c0_20 = arith.constant 0 : index
    %c0_21 = arith.constant 0 : index
    %45 = vector.load %arg10[%c0_19, %c0_20, %c0_21] : memref<1x7x256xf32, #tpu.memory_space<vmem>>, vector<1x7x256xf32>
    %46 = vector.shape_cast %45 : vector<1x7x256xf32> to vector<7x256xf32>
    %47 = vector.shape_cast %44 : vector<7x256xf32> to vector<1x7x256xf32>
    tpu.vector_store %arg10[%c0_19, %c0_20, %c0_21], %47 {strides = array<i32>} : memref<1x7x256xf32, #tpu.memory_space<vmem>>, vector<1x7x256xf32>,
    return
  }
  func.func @transform_0(%arg0: i32, %arg1: i32) -> i32 {
    %c0_i32 = arith.constant 0 : i32
    %c0_i32_0 = arith.constant 0 : i32
    return %c0_i32 : i32
  }
  func.func @transform_1(%arg0: i32, %arg1: i32) -> (i32, i32, i32) {
    %c0_i32 = arith.constant 0 : i32
    %c0_i32_0 = arith.constant 0 : i32
    return %arg0, %c0_i32, %arg1 : i32, i32, i32
  }
  func.func @transform_2(%arg0: i32, %arg1: i32) -> (i32, i32, i32) {
    %c0_i32 = arith.constant 0 : i32
    %c0_i32_0 = arith.constant 0 : i32
    return %arg0, %c0_i32, %arg1 : i32, i32, i32
  }
  func.func @transform_3(%arg0: i32, %arg1: i32) -> (i32, i32) {
    %c0_i32 = arith.constant 0 : i32
    %c0_i32_0 = arith.constant 0 : i32
    %c0_i32_1 = arith.constant 0 : i32
    return %c0_i32, %c0_i32_0 : i32, i32
  }
  func.func @transform_4(%arg0: i32, %arg1: i32) -> (i32, i32) {
    %c0_i32 = arith.constant 0 : i32
    %c0_i32_0 = arith.constant 0 : i32
    %c0_i32_1 = arith.constant 0 : i32
    return %c0_i32, %c0_i32_0 : i32, i32
  }
  func.func @transform_5(%arg0: i32, %arg1: i32) -> (i32, i32) {
    %c0_i32 = arith.constant 0 : i32
    %c0_i32_0 = arith.constant 0 : i32
    %c0_i32_1 = arith.constant 0 : i32
    return %c0_i32, %c0_i32_0 : i32, i32
  }
  func.func @transform_6(%arg0: i32, %arg1: i32) -> (i32, i32) {
    %c0_i32 = arith.constant 0 : i32
    %c0_i32_0 = arith.constant 0 : i32
    %c0_i32_1 = arith.constant 0 : i32
    return %c0_i32, %c0_i32_0 : i32, i32
  }
  func.func @transform_7(%arg0: i32, %arg1: i32) -> (i32, i32) {
    %c0_i32 = arith.constant 0 : i32
    %c0_i32_0 = arith.constant 0 : i32
    %c0_i32_1 = arith.constant 0 : i32
    return %c0_i32, %c0_i32_0 : i32, i32
  }
  func.func @transform_8(%arg0: i32, %arg1: i32) -> (i32, i32, i32) {
    %c0_i32 = arith.constant 0 : i32
    %c0_i32_0 = arith.constant 0 : i32
    return %arg0, %c0_i32, %arg1 : i32, i32, i32
  }
}

</mosaic_0001>

<llo_original>
// kernel: tpu_custom_call.1
$region0: #{tpu_custom_call.1}
  #allocation0 [shape = 'u32[]', space=smem, size = 0x4, offset = 0x4, fixed_abs, tag = 'smem constant byte address 0x4 - core index']
  #allocation1 [shape = 'u32[144,128]{1,0:T(1,128)}', space=vmem, size = 0x12000, scoped, tag = 'internal scratch']
  %s0 = inlined_call_operand.vmem [shape: f32[2], index: 0, kind: input, shape index: {}]
  %s1 = inlined_call_operand.hbm [shape: f32[2,256,256], index: 1, kind: input, shape index: {}]
  %s2 = inlined_call_operand.hbm [shape: f32[2,256,256], index: 2, kind: input, shape index: {}]
  %s3 = inlined_call_operand.vmem [shape: bf16[136,256], index: 3, kind: input, shape index: {}]
  %s4 = inlined_call_operand.hbm [shape: bf16[136,256], index: 4, kind: input, shape index: {}]
  %s5 = inlined_call_operand.vmem [shape: f32[128,1], index: 5, kind: input, shape index: {}]
  %s6 = inlined_call_operand.vmem [shape: bf16[7,128], index: 6, kind: input, shape index: {}]
  %s7 = inlined_call_operand.vmem [shape: f32[7,1], index: 7, kind: input, shape index: {}]
  %s8 = inlined_call_operand.vmem [shape: f32[2,7,256], index: 8, kind: output, shape index: {}]
  %s9 = sld [smem:[#allocation0]]
  $region81: #{tpu_custom_call.1} parent=0
    _
  %s11 = ssub.s32 1, %s9
  %s12 = scalar_select 0, %s11, %s9
  $region1: #{tpu_custom_call.1} parent=0
    #allocation2 [shape = 'u8[512]{0}', space=smem, size = 0x200, scoped, tag = 'input window, operand 0, single buffered']
    #allocation3 [shape = 's32[2]{0}', space=sflag, size = 0x8, scoped, tag = 'scoped memory for tpu_custom_call.1']
    #allocation4 [shape = 's32[2]{0}', space=sflag, size = 0x8, scoped, tag = 'scoped memory for tpu_custom_call.1']
    #allocation5 [shape = 'u8[524288]{0}', space=vmem, size = 0x80000, scoped, tag = 'input window, operand 1']
    #allocation6 [shape = 'u8[524288]{0}', space=vmem, size = 0x80000, scoped, tag = 'input window, operand 2']
    #allocation7 [shape = 's32[2]{0}', space=sflag, size = 0x8, scoped, tag = 'scoped memory for tpu_custom_call.1']
    #allocation8 [shape = 'u8[69632]{0}', space=vmem, size = 0x11000, scoped, tag = 'input window, operand 4, single buffered']
    %13 = vsyncpa [#allocation4], 0
    %14 = vsyncpa [#allocation3], 0
    %s15 = scalar_lea.sflag [#allocation3], 1
    %16 = vsyncpa %s15, 0
    %17 = vsyncpa [#allocation7], 0
    %s18 = scalar_lea.sflag [#allocation7], 1
    %19 = vsyncpa %s18, 0
    loop: start=0, step=1, limit=4
    $region2: #{tpu_custom_call.1} parent=1 // loop_pre_header
      _
    $region3: #{tpu_custom_call.1} parent=1 // loop_header
      %s21 = sphi 0, %s25
      %p22 = scmp.ge.s32.totalorder %s21, 4
      %s28 = sphi 0, %s40
      %s29 = sphi 0, %s36
      %s30 = sphi 0, %s28
      %s31 = sphi 0, %s29
      %s32 = sphi 0, %s30
      %s33 = sphi 0, %s31
      %s41 = sphi 0, %s41
      %s43 = sphi 0, %s41
      %s44 = sphi 0, %s43
      %s58 = sphi 0, %s44
      %s66 = sphi 0, %s68
      %s69 = sphi 0, %s66
      %s70 = sphi 0, %s69
      %s86 = sphi 0, %s70
      %s94 = sphi 0, %s96
      %s97 = sphi 0, %s94
      %s98 = sphi 0, %s97
      %s114 = sphi 0, %s98
      %s118 = sphi 0, %s118
      %s120 = sphi 0, %s118
      %s121 = sphi 0, %s120
      %s135 = sphi 0, %s121
      %s139 = sphi 0, %s139
      %s141 = sphi 0, %s139
      %s142 = sphi 0, %s141
      %s156 = sphi 0, %s142
      %s160 = sphi 0, %s160
      %s162 = sphi 0, %s160
      %s163 = sphi 0, %s162
      %s177 = sphi 0, %s163
      %s181 = sphi 0, %s181
      %s183 = sphi 0, %s181
      %s184 = sphi 0, %s183
      %s198 = sphi 0, %s184
      %s202 = sphi 0, %s202
      %s204 = sphi 0, %s202
      %s205 = sphi 0, %s204
      %s219 = sphi 0, %s205
      %s227 = sphi 0, %s229
      %s230 = sphi 0, %s227
      %s231 = sphi 0, %s230
      %s247 = sphi 0, %s231
    $region4: #{tpu_custom_call.1} parent=1 // loop_header_branch
      %24 = sbr.rel (%p22) target = $region8
    $region5: #{tpu_custom_call.1} parent=1 // loop_body
      %s26 = ssub.s32 %s21, 1
      %s27 = ssub.s32 %s21, 2
      %s34 = sadd.s32 1, %s29
      %p35 = scmp.ge.s32.totalorder %s34, 1
      %s36 = scalar_select %p35, 0, %s34
      %s37 = sadd.s32 1, %s28
      %s38 = scalar_select %p35, %s37, %s28
      %p39 = scmp.ge.s32.totalorder %s38, 2
      %s40 = scalar_select %p39, 0, %s38
      %s42 = sadd.s32 %s41, 1
      %p45 = scmp.eq.s32.totalorder %s21, 1
      %p46 = scmp.ne.s32.totalorder %s41, %s43
      %p47 = scmp.eq.s32.totalorder %s21, 0
      %p48 = por %p46, %p47
      %p49 = scmp.ne.s32.totalorder %s41, %s43
      %p50 = scmp.eq.s32.totalorder %s26, 1
      %p51 = por %p49, %p50
      %p52 = scmp.ne.s32.totalorder %s43, %s44
      %p53 = scmp.eq.s32.totalorder %s26, 0
      %p54 = por %p52, %p53
      %p55 = scmp.ne.s32.totalorder %s43, %s44
      %p56 = scmp.eq.s32.totalorder %s27, 1
      %p57 = por %p55, %p56
      %p59 = scmp.ne.s32.totalorder %s44, %s58
      %p60 = scmp.eq.s32.totalorder %s27, 0
      %p61 = por %p59, %p60
      %s62 = ssub.s32 %s28, %s40
      %s63 = ssub.s32 %s29, %s36
      %s64 = sor.u32 %s62, %s63
      %p65 = scmp.eq.s32.totalorder %s64, 0
      %s67 = sadd.s32 %s66, 1
      %s68 = scalar_select %p65, %s66, %s67
      %p71 = pneg %p65
      %p72 = scmp.eq.s32.totalorder %s21, 1
      %p73 = por %p71, %p72
      %p74 = scmp.ne.s32.totalorder %s66, %s69
      %p75 = scmp.eq.s32.totalorder %s21, 0
      %p76 = por %p74, %p75
      %p77 = scmp.ne.s32.totalorder %s66, %s69
      %p78 = scmp.eq.s32.totalorder %s26, 1
      %p79 = por %p77, %p78
      %p80 = scmp.ne.s32.totalorder %s69, %s70
      %p81 = scmp.eq.s32.totalorder %s26, 0
      %p82 = por %p80, %p81
      %p83 = scmp.ne.s32.totalorder %s69, %s70
      %p84 = scmp.eq.s32.totalorder %s27, 1
      %p85 = por %p83, %p84
      %p87 = scmp.ne.s32.totalorder %s70, %s86
      %p88 = scmp.eq.s32.totalorder %s27, 0
      %p89 = por %p87, %p88
      %s90 = ssub.s32 %s28, %s40
      %s91 = ssub.s32 %s29, %s36
      %s92 = sor.u32 %s90, %s91
      %p93 = scmp.eq.s32.totalorder %s92, 0
      %s95 = sadd.s32 %s94, 1
      %s96 = scalar_select %p93, %s94, %s95
      %p99 = pneg %p93
      %p100 = scmp.eq.s32.totalorder %s21, 1
      %p101 = por %p99, %p100
      %p102 = scmp.ne.s32.totalorder %s94, %s97
      %p103 = scmp.eq.s32.totalorder %s21, 0
      %p104 = por %p102, %p103
      %p105 = scmp.ne.s32.totalorder %s94, %s97
      %p106 = scmp.eq.s32.totalorder %s26, 1
      %p107 = por %p105, %p106
      %p108 = scmp.ne.s32.totalorder %s97, %s98
      %p109 = scmp.eq.s32.totalorder %s26, 0
      %p110 = por %p108, %p109
      %p111 = scmp.ne.s32.totalorder %s97, %s98
      %p112 = scmp.eq.s32.totalorder %s27, 1
      %p113 = por %p111, %p112
      %p115 = scmp.ne.s32.totalorder %s98, %s114
      %p116 = scmp.eq.s32.totalorder %s27, 0
      %p117 = por %p115, %p116
      %s119 = sadd.s32 %s118, 1
      %p122 = scmp.eq.s32.totalorder %s21, 1
      %p123 = scmp.ne.s32.totalorder %s118, %s120
      %p124 = scmp.eq.s32.totalorder %s21, 0
      %p125 = por %p123, %p124
      %p126 = scmp.ne.s32.totalorder %s118, %s120
      %p127 = scmp.eq.s32.totalorder %s26, 1
      %p128 = por %p126, %p127
      %p129 = scmp.ne.s32.totalorder %s120, %s121
      %p130 = scmp.eq.s32.totalorder %s26, 0
      %p131 = por %p129, %p130
      %p132 = scmp.ne.s32.totalorder %s120, %s121
      %p133 = scmp.eq.s32.totalorder %s27, 1
      %p134 = por %p132, %p133
      %p136 = scmp.ne.s32.totalorder %s121, %s135
      %p137 = scmp.eq.s32.totalorder %s27, 0
      %p138 = por %p136, %p137
      %s140 = sadd.s32 %s139, 1
      %p143 = scmp.eq.s32.totalorder %s21, 1
      %p144 = scmp.ne.s32.totalorder %s139, %s141
      %p145 = scmp.eq.s32.totalorder %s21, 0
      %p146 = por %p144, %p145
      %p147 = scmp.ne.s32.totalorder %s139, %s141
      %p148 = scmp.eq.s32.totalorder %s26, 1
      %p149 = por %p147, %p148
      %p150 = scmp.ne.s32.totalorder %s141, %s142
      %p151 = scmp.eq.s32.totalorder %s26, 0
      %p152 = por %p150, %p151
      %p153 = scmp.ne.s32.totalorder %s141, %s142
      %p154 = scmp.eq.s32.totalorder %s27, 1
      %p155 = por %p153, %p154
      %p157 = scmp.ne.s32.totalorder %s142, %s156
      %p158 = scmp.eq.s32.totalorder %s27, 0
      %p159 = por %p157, %p158
      %s161 = sadd.s32 %s160, 1
      %p164 = scmp.eq.s32.totalorder %s21, 1
      %p165 = scmp.ne.s32.totalorder %s160, %s162
      %p166 = scmp.eq.s32.totalorder %s21, 0
      %p167 = por %p165, %p166
      %p168 = scmp.ne.s32.totalorder %s160, %s162
      %p169 = scmp.eq.s32.totalorder %s26, 1
      %p170 = por %p168, %p169
      %p171 = scmp.ne.s32.totalorder %s162, %s163
      %p172 = scmp.eq.s32.totalorder %s26, 0
      %p173 = por %p171, %p172
      %p174 = scmp.ne.s32.totalorder %s162, %s163
      %p175 = scmp.eq.s32.totalorder %s27, 1
      %p176 = por %p174, %p175
      %p178 = scmp.ne.s32.totalorder %s163, %s177
      %p179 = scmp.eq.s32.totalorder %s27, 0
      %p180 = por %p178, %p179
      %s182 = sadd.s32 %s181, 1
      %p185 = scmp.eq.s32.totalorder %s21, 1
      %p186 = scmp.ne.s32.totalorder %s181, %s183
      %p187 = scmp.eq.s32.totalorder %s21, 0
      %p188 = por %p186, %p187
      %p189 = scmp.ne.s32.totalorder %s181, %s183
      %p190 = scmp.eq.s32.totalorder %s26, 1
      %p191 = por %p189, %p190
      %p192 = scmp.ne.s32.totalorder %s183, %s184
      %p193 = scmp.eq.s32.totalorder %s26, 0
      %p194 = por %p192, %p193
      %p195 = scmp.ne.s32.totalorder %s183, %s184
      %p196 = scmp.eq.s32.totalorder %s27, 1
      %p197 = por %p195, %p196
      %p199 = scmp.ne.s32.totalorder %s184, %s198
      %p200 = scmp.eq.s32.totalorder %s27, 0
      %p201 = por %p199, %p200
      %s203 = sadd.s32 %s202, 1
      %p206 = scmp.eq.s32.totalorder %s21, 1
      %p207 = scmp.ne.s32.totalorder %s202, %s204
      %p208 = scmp.eq.s32.totalorder %s21, 0
      %p209 = por %p207, %p208
      %p210 = scmp.ne.s32.totalorder %s202, %s204
      %p211 = scmp.eq.s32.totalorder %s26, 1
      %p212 = por %p210, %p211
      %p213 = scmp.ne.s32.totalorder %s204, %s205
      %p214 = scmp.eq.s32.totalorder %s26, 0
      %p215 = por %p213, %p214
      %p216 = scmp.ne.s32.totalorder %s204, %s205
      %p217 = scmp.eq.s32.totalorder %s27, 1
      %p218 = por %p216, %p217
      %p220 = scmp.ne.s32.totalorder %s205, %s219
      %p221 = scmp.eq.s32.totalorder %s27, 0
      %p222 = por %p220, %p221
      %s223 = ssub.s32 %s28, %s40
      %s224 = ssub.s32 %s29, %s36
      %s225 = sor.u32 %s223, %s224
      %p226 = scmp.eq.s32.totalorder %s225, 0
      %s228 = sadd.s32 %s227, 1
      %s229 = scalar_select %p226, %s227, %s228
      %p232 = pneg %p226
      %p233 = scmp.eq.s32.totalorder %s21, 1
      %p234 = por %p232, %p233
      %p235 = scmp.ne.s32.totalorder %s227, %s230
      %p236 = scmp.eq.s32.totalorder %s21, 0
      %p237 = por %p235, %p236
      %p238 = scmp.ne.s32.totalorder %s227, %s230
      %p239 = scmp.eq.s32.totalorder %s26, 1
      %p240 = por %p238, %p239
      %p241 = scmp.ne.s32.totalorder %s230, %s231
      %p242 = scmp.eq.s32.totalorder %s26, 0
      %p243 = por %p241, %p242
      %p244 = scmp.ne.s32.totalorder %s230, %s231
      %p245 = scmp.eq.s32.totalorder %s27, 1
      %p246 = por %p244, %p245
      %p248 = scmp.ne.s32.totalorder %s231, %s247
      %p249 = scmp.eq.s32.totalorder %s27, 0
      %p250 = por %p248, %p249
      %p251 = scmp.le.s32.totalorder 1, %s21
      %p252 = scmp.lt.s32.totalorder %s21, 3
      %p253 = pnand %p251, %p252
      %p254 = pneg %p253
      // Predicated region
      $region9: #{tpu_custom_call.1} parent=5 // pred_check
        _
      $region10: #{tpu_custom_call.1} parent=5 // pred_check_branch
        %256 = sbr.rel (%p253) target = $region12
      $region11: #{tpu_custom_call.1} parent=5 // pred_region
        %s257 = ssub.s32 %s21, 1
        // Predicated region
        $region13: #{tpu_custom_call.1} parent=11 // pred_check
          %p258 = pneg %p54
        $region14: #{tpu_custom_call.1} parent=11 // pred_check_branch
          %260 = sbr.rel (%p258) target = $region16
        $region15: #{tpu_custom_call.1} parent=11 // pred_region
          %s262 = ssub.s32 16, 16
          %263 = vsyncadd [#allocation4], %s262
          %s265 = sshll.u32 %s0, 4
          %s266 = int_to_ptr.vmem [resolvable:$true] %s265
          %268 = dma.vmem_to_smem %s266, 16, [#allocation2], [#allocation4]
        $region16: #{tpu_custom_call.1} parent=11 // pred_fallthru
          _
        // Predicated region
        $region17: #{tpu_custom_call.1} parent=11 // pred_check
          %p269 = pneg %p131
        $region18: #{tpu_custom_call.1} parent=11 // pred_check_branch
          %271 = sbr.rel (%p269) target = $region20
        $region19: #{tpu_custom_call.1} parent=11 // pred_region
          _
        $region20: #{tpu_custom_call.1} parent=11 // pred_fallthru
          _
        // Predicated region
        $region21: #{tpu_custom_call.1} parent=11 // pred_check
          %p272 = pneg %p152
        $region22: #{tpu_custom_call.1} parent=11 // pred_check_branch
          %274 = sbr.rel (%p272) target = $region24
        $region23: #{tpu_custom_call.1} parent=11 // pred_region
          %s276 = ssub.s32 2176, 2176
          %277 = vsyncadd [#allocation7], %s276
          %s278 = sshll.u32 [#allocation8], 4
          %s279 = int_to_ptr.vmem [resolvable:$true] %s278
          %284 = dma.hbm_to_vmem [thread:$0]  %s4, 2176, %s279, [#allocation7], 128, 128, 8
        $region24: #{tpu_custom_call.1} parent=11 // pred_fallthru
          _
        // Predicated region
        $region25: #{tpu_custom_call.1} parent=11 // pred_check
          %p285 = pneg %p173
        $region26: #{tpu_custom_call.1} parent=11 // pred_check_branch
          %287 = sbr.rel (%p285) target = $region28
        $region27: #{tpu_custom_call.1} parent=11 // pred_region
          _
        $region28: #{tpu_custom_call.1} parent=11 // pred_fallthru
          _
        // Predicated region
        $region29: #{tpu_custom_call.1} parent=11 // pred_check
          %p288 = pneg %p194
        $region30: #{tpu_custom_call.1} parent=11 // pred_check_branch
          %290 = sbr.rel (%p288) target = $region32
        $region31: #{tpu_custom_call.1} parent=11 // pred_region
          _
        $region32: #{tpu_custom_call.1} parent=11 // pred_fallthru
          _
        // Predicated region
        $region33: #{tpu_custom_call.1} parent=11 // pred_check
          %p291 = pneg %p215
        $region34: #{tpu_custom_call.1} parent=11 // pred_check_branch
          %293 = sbr.rel (%p291) target = $region36
        $region35: #{tpu_custom_call.1} parent=11 // pred_region
          _
        $region36: #{tpu_custom_call.1} parent=11 // pred_fallthru
          _
      $region12: #{tpu_custom_call.1} parent=5 // pred_fallthru
        _
      %p294 = scmp.lt.s32.totalorder %s21, 2
      // Predicated region
      $region37: #{tpu_custom_call.1} parent=5 // pred_check
        %p295 = pneg %p294
      $region38: #{tpu_custom_call.1} parent=5 // pred_check_branch
        %297 = sbr.rel (%p295) target = $region40
      $region39: #{tpu_custom_call.1} parent=5 // pred_region
        // Predicated region
        $region41: #{tpu_custom_call.1} parent=39 // pred_check
          %p298 = pneg %p76
        $region42: #{tpu_custom_call.1} parent=39 // pred_check_branch
          %300 = sbr.rel (%p298) target = $region44
        $region43: #{tpu_custom_call.1} parent=39 // pred_region
          %s301 = sand.u32 %s66, 1
          %s302 = scalar_lea.sflag [#allocation3], %s301
          %s303 = sand.u32 %s66, 1
          %s304 = smul.addr %s303, 512
          %s305 = scalar_lea.vmem [#allocation5], %s304
          %s306 = smul.u32 2, %s29
          %s308 = ssub.s32 8192, 8192
          %309 = vsyncadd %s302, %s308
          %s310 = smul.addr %s28, 64
          %s311 = sadd.s32 %s306, %s310
          %s312 = smul.addr %s311, 128
          %s313 = scalar_lea.hbm %s1, %s312
          %s314 = sshll.u32 %s305, 4
          %s315 = int_to_ptr.vmem [resolvable:$true] %s314
          %320 = dma.hbm_to_vmem [thread:$0]  %s313, 8192, %s315, %s302, 256, 256, 16
        $region44: #{tpu_custom_call.1} parent=39 // pred_fallthru
          _
        // Predicated region
        $region45: #{tpu_custom_call.1} parent=39 // pred_check
          %p321 = pneg %p104
        $region46: #{tpu_custom_call.1} parent=39 // pred_check_branch
          %323 = sbr.rel (%p321) target = $region48
        $region47: #{tpu_custom_call.1} parent=39 // pred_region
          %s324 = sand.u32 %s21, 1
          %s325 = scalar_lea.sflag [#allocation7], %s324
          %s326 = sand.u32 %s94, 1
          %s327 = smul.addr %s326, 512
          %s328 = scalar_lea.vmem [#allocation6], %s327
          %s329 = smul.u32 2, %s29
          %s331 = ssub.s32 8192, 8192
          %332 = vsyncadd %s325, %s331
          %s333 = smul.addr %s28, 64
          %s334 = sadd.s32 %s329, %s333
          %s335 = smul.addr %s334, 128
          %s336 = scalar_lea.hbm %s2, %s335
          %s337 = sshll.u32 %s328, 4
          %s338 = int_to_ptr.vmem [resolvable:$true] %s337
          %343 = dma.hbm_to_vmem [thread:$0]  %s336, 8192, %s338, %s325, 256, 256, 16
        $region48: #{tpu_custom_call.1} parent=39 // pred_fallthru
          _
      $region40: #{tpu_custom_call.1} parent=5 // pred_fallthru
        _
      %p344 = scmp.le.s32.totalorder 1, %s21
      %p345 = scmp.lt.s32.totalorder %s21, 3
      %p346 = pnand %p344, %p345
      %p347 = pneg %p346
      // Predicated region
      $region49: #{tpu_custom_call.1} parent=5 // pred_check
        _
      $region50: #{tpu_custom_call.1} parent=5 // pred_check_branch
        %349 = sbr.rel (%p346) target = $region52
      $region51: #{tpu_custom_call.1} parent=5 // pred_region
        %s350 = ssub.s32 %s21, 1
        // Predicated region
        $region53: #{tpu_custom_call.1} parent=51 // pred_check
          %p351 = pneg %p54
        $region54: #{tpu_custom_call.1} parent=51 // pred_check_branch
          %353 = sbr.rel (%p351) target = $region56
        $region55: #{tpu_custom_call.1} parent=51 // pred_region
          %354 = dma.done [#allocation4], 16
        $region56: #{tpu_custom_call.1} parent=51 // pred_fallthru
          _
        %s355 = sand.u32 %s69, 1
        %s356 = scalar_lea.sflag [#allocation3], %s355
        %s357 = sand.u32 %s69, 1
        %s358 = smul.addr %s357, 512
        %s359 = scalar_lea.vmem [#allocation5], %s358
        // Predicated region
        $region57: #{tpu_custom_call.1} parent=51 // pred_check
          %p360 = pneg %p82
        $region58: #{tpu_custom_call.1} parent=51 // pred_check_branch
          %362 = sbr.rel (%p360) target = $region60
        $region59: #{tpu_custom_call.1} parent=51 // pred_region
          %363 = dma.done %s356, 8192
        $region60: #{tpu_custom_call.1} parent=51 // pred_fallthru
          _
        %s364 = sand.u32 %s26, 1
        %s365 = scalar_lea.sflag [#allocation7], %s364
        %s366 = sand.u32 %s97, 1
        %s367 = smul.addr %s366, 512
        %s368 = scalar_lea.vmem [#allocation6], %s367
        // Predicated region
        $region61: #{tpu_custom_call.1} parent=51 // pred_check
          %p369 = pneg %p110
        $region62: #{tpu_custom_call.1} parent=51 // pred_check_branch
          %371 = sbr.rel (%p369) target = $region64
        $region63: #{tpu_custom_call.1} parent=51 // pred_region
          %372 = dma.done %s365, 8192
        $region64: #{tpu_custom_call.1} parent=51 // pred_fallthru
          _
        // Predicated region
        $region65: #{tpu_custom_call.1} parent=51 // pred_check
          %p373 = pneg %p152
        $region66: #{tpu_custom_call.1} parent=51 // pred_check_branch
          %375 = sbr.rel (%p373) target = $region68
        $region67: #{tpu_custom_call.1} parent=51 // pred_region
          %376 = dma.done [#allocation7], 2176
        $region68: #{tpu_custom_call.1} parent=51 // pred_fallthru
          _
        %377 = sfence
        %p378 = pneg %p54
        %p379 = pneg %p51
        %s380 = sand.u32 %s69, 1
        %s381 = scalar_lea.sflag [#allocation3], %s380
        %s382 = sand.u32 %s69, 1
        %s383 = smul.addr %s382, 512
        %s384 = scalar_lea.vmem [#allocation5], %s383
        %p385 = pneg %p82
        %p386 = pneg %p79
        %s387 = sand.u32 %s26, 1
        %s388 = scalar_lea.sflag [#allocation7], %s387
        %s389 = sand.u32 %s97, 1
        %s390 = smul.addr %s389, 512
        %s391 = scalar_lea.vmem [#allocation6], %s390
        %p392 = pneg %p110
        %p393 = pneg %p107
        %p394 = pneg %p131
        %p395 = pneg %p128
        %p396 = pneg %p152
        %p397 = pneg %p149
        %p398 = pneg %p173
        %p399 = pneg %p170
        %p400 = pneg %p194
        %p401 = pneg %p191
        %p402 = pneg %p215
        %p403 = pneg %p212
        %p404 = pneg %p243
        %p405 = pneg %p240
        %s406 = smul.u32 2, %s31
        %p407 = scmp.lt.s32.totalorder %s30, 1
        %s408 = scalar_select %p407, %s30, 1
        %p409 = scmp.lt.s32.totalorder %s406, 1
        %s410 = scalar_select %p409, %s406, 1
        %s411 = smul.addr %s408, 2
        %s412 = sadd.s32 %s410, %s411
        %s413 = smul.addr %s412, 8
        %s414 = scalar_lea.vmem %s8, %s413
        %s415 = smul.u32 2, %s31
        %s416 = smul.u32 2, %s31
        %s417 = smul.u32 2, %s31
        %p418 = scmp.lt.s32.totalorder %s30, 1
        %s419 = scalar_select %p418, %s30, 1
        %p420 = scmp.lt.s32.totalorder %s417, 1
        %s421 = scalar_select %p420, %s417, 1
        %s422 = smul.addr %s419, 2
        %s423 = sadd.s32 %s421, %s422
        %s424 = smul.addr %s423, 8
        %s425 = scalar_lea.vmem %s8, %s424
        %s426 = smul.u32 2, %s31
        %v428 = vld [vmem:[%s359] sm:$0xff]
        %v429 = vld [vmem:[%s359 + $0x8] sm:$0xff]
        %v430 = vld [vmem:[%s359 + $0x10] sm:$0xff]
        %v431 = vld [vmem:[%s359 + $0x18] sm:$0xff]
        %v432 = vld [vmem:[%s359 + $0x20] sm:$0xff]
        %v433 = vld [vmem:[%s359 + $0x28] sm:$0xff]
        %v434 = vld [vmem:[%s359 + $0x30] sm:$0xff]
        %v435 = vld [vmem:[%s359 + $0x38] sm:$0xff]
        %v436 = vld [vmem:[%s359 + $0x40] sm:$0xff]
        %v437 = vld [vmem:[%s359 + $0x48] sm:$0xff]
        %v438 = vld [vmem:[%s359 + $0x50] sm:$0xff]
        %v439 = vld [vmem:[%s359 + $0x58] sm:$0xff]
        %v440 = vld [vmem:[%s359 + $0x60] sm:$0xff]
        %v441 = vld [vmem:[%s359 + $0x68] sm:$0xff]
        %v442 = vld [vmem:[%s359 + $0x70] sm:$0xff]
        %v443 = vld [vmem:[%s359 + $0x78] sm:$0xff]
        %v444 = vld [vmem:[%s359 + $0x80] sm:$0xff]
        %v445 = vld [vmem:[%s359 + $0x88] sm:$0xff]
        %v446 = vld [vmem:[%s359 + $0x90] sm:$0xff]
        %v447 = vld [vmem:[%s359 + $0x98] sm:$0xff]
        %v448 = vld [vmem:[%s359 + $0xa0] sm:$0xff]
        %v449 = vld [vmem:[%s359 + $0xa8] sm:$0xff]
        %v450 = vld [vmem:[%s359 + $0xb0] sm:$0xff]
        %v451 = vld [vmem:[%s359 + $0xb8] sm:$0xff]
        %v452 = vld [vmem:[%s359 + $0xc0] sm:$0xff]
        %v453 = vld [vmem:[%s359 + $0xc8] sm:$0xff]
        %v454 = vld [vmem:[%s359 + $0xd0] sm:$0xff]
        %v455 = vld [vmem:[%s359 + $0xd8] sm:$0xff]
        %v456 = vld [vmem:[%s359 + $0xe0] sm:$0xff]
        %v457 = vld [vmem:[%s359 + $0xe8] sm:$0xff]
        %v458 = vld [vmem:[%s359 + $0xf0] sm:$0xff]
        %v459 = vld [vmem:[%s359 + $0xf8] sm:$0xff]
        %v460 = vld [vmem:[%s359 + $0x100] sm:$0xff]
        %v461 = vld [vmem:[%s359 + $0x108] sm:$0xff]
        %v462 = vld [vmem:[%s359 + $0x110] sm:$0xff]
        %v463 = vld [vmem:[%s359 + $0x118] sm:$0xff]
        %v464 = vld [vmem:[%s359 + $0x120] sm:$0xff]
        %v465 = vld [vmem:[%s359 + $0x128] sm:$0xff]
        %v466 = vld [vmem:[%s359 + $0x130] sm:$0xff]
        %v467 = vld [vmem:[%s359 + $0x138] sm:$0xff]
        %v468 = vld [vmem:[%s359 + $0x140] sm:$0xff]
        %v469 = vld [vmem:[%s359 + $0x148] sm:$0xff]
        %v470 = vld [vmem:[%s359 + $0x150] sm:$0xff]
        %v471 = vld [vmem:[%s359 + $0x158] sm:$0xff]
        %v472 = vld [vmem:[%s359 + $0x160] sm:$0xff]
        %v473 = vld [vmem:[%s359 + $0x168] sm:$0xff]
        %v474 = vld [vmem:[%s359 + $0x170] sm:$0xff]
        %v475 = vld [vmem:[%s359 + $0x178] sm:$0xff]
        %v476 = vld [vmem:[%s359 + $0x180] sm:$0xff]
        %v477 = vld [vmem:[%s359 + $0x188] sm:$0xff]
        %v478 = vld [vmem:[%s359 + $0x190] sm:$0xff]
        %v479 = vld [vmem:[%s359 + $0x198] sm:$0xff]
        %v480 = vld [vmem:[%s359 + $0x1a0] sm:$0xff]
        %v481 = vld [vmem:[%s359 + $0x1a8] sm:$0xff]
        %v482 = vld [vmem:[%s359 + $0x1b0] sm:$0xff]
        %v483 = vld [vmem:[%s359 + $0x1b8] sm:$0xff]
        %v484 = vld [vmem:[%s359 + $0x1c0] sm:$0xff]
        %v485 = vld [vmem:[%s359 + $0x1c8] sm:$0xff]
        %v486 = vld [vmem:[%s359 + $0x1d0] sm:$0xff]
        %v487 = vld [vmem:[%s359 + $0x1d8] sm:$0xff]
        %v488 = vld [vmem:[%s359 + $0x1e0] sm:$0xff]
        %v489 = vld [vmem:[%s359 + $0x1e8] sm:$0xff]
        %v490 = vld [vmem:[%s359 + $0x1f0] sm:$0xff]
        %v491 = vld [vmem:[%s359 + $0x1f8] sm:$0xff]
        %v492 = vpack.c.bf16 %v430, %v428
        %v493 = vpack.c.bf16 %v431, %v429
        %v494 = vpack.c.bf16 %v434, %v432
        %v495 = vpack.c.bf16 %v435, %v433
        %v496 = vpack.c.bf16 %v438, %v436
        %v497 = vpack.c.bf16 %v439, %v437
        %v498 = vpack.c.bf16 %v442, %v440
        %v499 = vpack.c.bf16 %v443, %v441
        %v500 = vpack.c.bf16 %v446, %v444
        %v501 = vpack.c.bf16 %v447, %v445
        %v502 = vpack.c.bf16 %v450, %v448
        %v503 = vpack.c.bf16 %v451, %v449
        %v504 = vpack.c.bf16 %v454, %v452
        %v505 = vpack.c.bf16 %v455, %v453
        %v506 = vpack.c.bf16 %v458, %v456
        %v507 = vpack.c.bf16 %v459, %v457
        %v508 = vpack.c.bf16 %v462, %v460
        %v509 = vpack.c.bf16 %v463, %v461
        %v510 = vpack.c.bf16 %v466, %v464
        %v511 = vpack.c.bf16 %v467, %v465
        %v512 = vpack.c.bf16 %v470, %v468
        %v513 = vpack.c.bf16 %v471, %v469
        %v514 = vpack.c.bf16 %v474, %v472
        %v515 = vpack.c.bf16 %v475, %v473
        %v516 = vpack.c.bf16 %v478, %v476
        %v517 = vpack.c.bf16 %v479, %v477
        %v518 = vpack.c.bf16 %v482, %v480
        %v519 = vpack.c.bf16 %v483, %v481
        %v520 = vpack.c.bf16 %v486, %v484
        %v521 = vpack.c.bf16 %v487, %v485
        %v522 = vpack.c.bf16 %v490, %v488
        %v523 = vpack.c.bf16 %v491, %v489
        %v524 = vld [vmem:[%s368] sm:$0xff]
        %v525 = vld [vmem:[%s368 + $0x8] sm:$0xff]
        %v526 = vld [vmem:[%s368 + $0x10] sm:$0xff]
        %v527 = vld [vmem:[%s368 + $0x18] sm:$0xff]
        %v528 = vld [vmem:[%s368 + $0x20] sm:$0xff]
        %v529 = vld [vmem:[%s368 + $0x28] sm:$0xff]
        %v530 = vld [vmem:[%s368 + $0x30] sm:$0xff]
        %v531 = vld [vmem:[%s368 + $0x38] sm:$0xff]
        %v532 = vld [vmem:[%s368 + $0x40] sm:$0xff]
        %v533 = vld [vmem:[%s368 + $0x48] sm:$0xff]
        %v534 = vld [vmem:[%s368 + $0x50] sm:$0xff]
        %v535 = vld [vmem:[%s368 + $0x58] sm:$0xff]
        %v536 = vld [vmem:[%s368 + $0x60] sm:$0xff]
        %v537 = vld [vmem:[%s368 + $0x68] sm:$0xff]
        %v538 = vld [vmem:[%s368 + $0x70] sm:$0xff]
        %v539 = vld [vmem:[%s368 + $0x78] sm:$0xff]
        %v540 = vld [vmem:[%s368 + $0x80] sm:$0xff]
        %v541 = vld [vmem:[%s368 + $0x88] sm:$0xff]
        %v542 = vld [vmem:[%s368 + $0x90] sm:$0xff]
        %v543 = vld [vmem:[%s368 + $0x98] sm:$0xff]
        %v544 = vld [vmem:[%s368 + $0xa0] sm:$0xff]
        %v545 = vld [vmem:[%s368 + $0xa8] sm:$0xff]
        %v546 = vld [vmem:[%s368 + $0xb0] sm:$0xff]
        %v547 = vld [vmem:[%s368 + $0xb8] sm:$0xff]
        %v548 = vld [vmem:[%s368 + $0xc0] sm:$0xff]
        %v549 = vld [vmem:[%s368 + $0xc8] sm:$0xff]
        %v550 = vld [vmem:[%s368 + $0xd0] sm:$0xff]
        %v551 = vld [vmem:[%s368 + $0xd8] sm:$0xff]
        %v552 = vld [vmem:[%s368 + $0xe0] sm:$0xff]
        %v553 = vld [vmem:[%s368 + $0xe8] sm:$0xff]
        %v554 = vld [vmem:[%s368 + $0xf0] sm:$0xff]
        %v555 = vld [vmem:[%s368 + $0xf8] sm:$0xff]
        %v556 = vld [vmem:[%s368 + $0x100] sm:$0xff]
        %v557 = vld [vmem:[%s368 + $0x108] sm:$0xff]
        %v558 = vld [vmem:[%s368 + $0x110] sm:$0xff]
        %v559 = vld [vmem:[%s368 + $0x118] sm:$0xff]
        %v560 = vld [vmem:[%s368 + $0x120] sm:$0xff]
        %v561 = vld [vmem:[%s368 + $0x128] sm:$0xff]
        %v562 = vld [vmem:[%s368 + $0x130] sm:$0xff]
        %v563 = vld [vmem:[%s368 + $0x138] sm:$0xff]
        %v564 = vld [vmem:[%s368 + $0x140] sm:$0xff]
        %v565 = vld [vmem:[%s368 + $0x148] sm:$0xff]
        %v566 = vld [vmem:[%s368 + $0x150] sm:$0xff]
        %v567 = vld [vmem:[%s368 + $0x158] sm:$0xff]
        %v568 = vld [vmem:[%s368 + $0x160] sm:$0xff]
        %v569 = vld [vmem:[%s368 + $0x168] sm:$0xff]
        %v570 = vld [vmem:[%s368 + $0x170] sm:$0xff]
        %v571 = vld [vmem:[%s368 + $0x178] sm:$0xff]
        %v572 = vld [vmem:[%s368 + $0x180] sm:$0xff]
        %v573 = vld [vmem:[%s368 + $0x188] sm:$0xff]
        %v574 = vld [vmem:[%s368 + $0x190] sm:$0xff]
        %v575 = vld [vmem:[%s368 + $0x198] sm:$0xff]
        %v576 = vld [vmem:[%s368 + $0x1a0] sm:$0xff]
        %v577 = vld [vmem:[%s368 + $0x1a8] sm:$0xff]
        %v578 = vld [vmem:[%s368 + $0x1b0] sm:$0xff]
        %v579 = vld [vmem:[%s368 + $0x1b8] sm:$0xff]
        %v580 = vld [vmem:[%s368 + $0x1c0] sm:$0xff]
        %v581 = vld [vmem:[%s368 + $0x1c8] sm:$0xff]
        %v582 = vld [vmem:[%s368 + $0x1d0] sm:$0xff]
        %v583 = vld [vmem:[%s368 + $0x1d8] sm:$0xff]
        %v584 = vld [vmem:[%s368 + $0x1e0] sm:$0xff]
        %v585 = vld [vmem:[%s368 + $0x1e8] sm:$0xff]
        %v586 = vld [vmem:[%s368 + $0x1f0] sm:$0xff]
        %v587 = vld [vmem:[%s368 + $0x1f8] sm:$0xff]
        %v588 = vpack.c.bf16 %v526, %v524
        %v589 = vpack.c.bf16 %v527, %v525
        %v590 = vpack.c.bf16 %v530, %v528
        %v591 = vpack.c.bf16 %v531, %v529
        %v592 = vpack.c.bf16 %v534, %v532
        %v593 = vpack.c.bf16 %v535, %v533
        %v594 = vpack.c.bf16 %v538, %v536
        %v595 = vpack.c.bf16 %v539, %v537
        %v596 = vpack.c.bf16 %v542, %v540
        %v597 = vpack.c.bf16 %v543, %v541
        %v598 = vpack.c.bf16 %v546, %v544
        %v599 = vpack.c.bf16 %v547, %v545
        %v600 = vpack.c.bf16 %v550, %v548
        %v601 = vpack.c.bf16 %v551, %v549
        %v602 = vpack.c.bf16 %v554, %v552
        %v603 = vpack.c.bf16 %v555, %v553
        %v604 = vpack.c.bf16 %v558, %v556
        %v605 = vpack.c.bf16 %v559, %v557
        %v606 = vpack.c.bf16 %v562, %v560
        %v607 = vpack.c.bf16 %v563, %v561
        %v608 = vpack.c.bf16 %v566, %v564
        %v609 = vpack.c.bf16 %v567, %v565
        %v610 = vpack.c.bf16 %v570, %v568
        %v611 = vpack.c.bf16 %v571, %v569
        %v612 = vpack.c.bf16 %v574, %v572
        %v613 = vpack.c.bf16 %v575, %v573
        %v614 = vpack.c.bf16 %v578, %v576
        %v615 = vpack.c.bf16 %v579, %v577
        %v616 = vpack.c.bf16 %v582, %v580
        %v617 = vpack.c.bf16 %v583, %v581
        %v618 = vpack.c.bf16 %v586, %v584
        %v619 = vpack.c.bf16 %v587, %v585
        %v620 = vld [vmem:[%s3] sm:$0xff]
        %v621 = vld [vmem:[%s3 + $0x8] sm:$0xff]
        %v622 = vld [vmem:[%s3 + $0x10] sm:$0xff]
        %v623 = vld [vmem:[%s3 + $0x18] sm:$0xff]
        %v624 = vld [vmem:[%s3 + $0x20] sm:$0xff]
        %v625 = vld [vmem:[%s3 + $0x28] sm:$0xff]
        %v626 = vld [vmem:[%s3 + $0x30] sm:$0xff]
        %v627 = vld [vmem:[%s3 + $0x38] sm:$0xff]
        %v628 = vld [vmem:[%s3 + $0x40] sm:$0xff]
        %v629 = vld [vmem:[%s3 + $0x48] sm:$0xff]
        %v630 = vld [vmem:[%s3 + $0x50] sm:$0xff]
        %v631 = vld [vmem:[%s3 + $0x58] sm:$0xff]
        %v632 = vld [vmem:[%s3 + $0x60] sm:$0xff]
        %v633 = vld [vmem:[%s3 + $0x68] sm:$0xff]
        %v634 = vld [vmem:[%s3 + $0x70] sm:$0xff]
        %v635 = vld [vmem:[%s3 + $0x78] sm:$0xff]
        %v636 = vld [vmem:[%s3 + $0x80] sm:$0xff]
        %v654 = vunpack.c.l.b16 %v620
        %v655 = vunpack.c.h.b16 %v620
        %v656 = vunpack.c.l.b16 %v621
        %v657 = vunpack.c.h.b16 %v621
        %v658 = vunpack.c.l.b16 %v622
        %v659 = vunpack.c.h.b16 %v622
        %v660 = vunpack.c.l.b16 %v623
        %v661 = vunpack.c.h.b16 %v623
        %v662 = vunpack.c.l.b16 %v624
        %v663 = vunpack.c.h.b16 %v624
        %v664 = vunpack.c.l.b16 %v625
        %v665 = vunpack.c.h.b16 %v625
        %v666 = vunpack.c.l.b16 %v626
        %v667 = vunpack.c.h.b16 %v626
        %v668 = vunpack.c.l.b16 %v627
        %v669 = vunpack.c.h.b16 %v627
        %v670 = vunpack.c.l.b16 %v628
        %v671 = vunpack.c.h.b16 %v628
        %v672 = vunpack.c.l.b16 %v629
        %v673 = vunpack.c.h.b16 %v629
        %v674 = vunpack.c.l.b16 %v630
        %v675 = vunpack.c.h.b16 %v630
        %v676 = vunpack.c.l.b16 %v631
        %v677 = vunpack.c.h.b16 %v631
        %v678 = vunpack.c.l.b16 %v632
        %v679 = vunpack.c.h.b16 %v632
        %v680 = vunpack.c.l.b16 %v633
        %v681 = vunpack.c.h.b16 %v633
        %v682 = vunpack.c.l.b16 %v634
        %v683 = vunpack.c.h.b16 %v634
        %v684 = vunpack.c.l.b16 %v635
        %v685 = vunpack.c.h.b16 %v635
        %v686 = vunpack.c.l.b16 %v636
        %v687 = vunpack.c.h.b16 %v636
        %v688 = vpack.c.b16 %v656, %v654
        %v689 = vpack.c.b16 %v657, %v655
        %v690 = vpack.c.b16 %v660, %v658
        %v691 = vpack.c.b16 %v661, %v659
        %v692 = vpack.c.b16 %v664, %v662
        %v693 = vpack.c.b16 %v665, %v663
        %v694 = vpack.c.b16 %v668, %v666
        %v695 = vpack.c.b16 %v669, %v667
        %v696 = vpack.c.b16 %v672, %v670
        %v697 = vpack.c.b16 %v673, %v671
        %v698 = vpack.c.b16 %v676, %v674
        %v699 = vpack.c.b16 %v677, %v675
        %v700 = vpack.c.b16 %v680, %v678
        %v701 = vpack.c.b16 %v681, %v679
        %v702 = vpack.c.b16 %v684, %v682
        %v703 = vpack.c.b16 %v685, %v683
        %v704 = vpack.c.b16 %v686, %v686
        %v705 = vpack.c.b16 %v687, %v687
        %724 = vmatprep.subr.bf16.mxu0 %v493
        %725 = vmatpush1.bf16.msra.mxu0 %v492
        %726 = vmatprep.subr.bf16.mxu0 %v495
        %727 = vmatpush1.bf16.msra.mxu0 %v494
        %728 = vmatprep.subr.bf16.mxu0 %v497
        %729 = vmatpush1.bf16.msra.mxu0 %v496
        %730 = vmatprep.subr.bf16.mxu0 %v499
        %731 = vmatpush1.bf16.msra.mxu0 %v498
        %732 = vmatprep.subr.bf16.mxu0 %v501
        %733 = vmatpush1.bf16.msra.mxu0 %v500
        %734 = vmatprep.subr.bf16.mxu0 %v503
        %735 = vmatpush1.bf16.msra.mxu0 %v502
        %736 = vmatprep.subr.bf16.mxu0 %v505
        %737 = vmatpush1.bf16.msra.mxu0 %v504
        %738 = vmatprep.subr.bf16.mxu0 %v507
        %739 = vmatpush1.bf16.msra.mxu0 %v506
        %740 = vmatprep.subr.bf16.mxu0 %v509
        %741 = vmatpush1.bf16.msra.mxu0 %v508
        %742 = vmatprep.subr.bf16.mxu0 %v511
        %743 = vmatpush1.bf16.msra.mxu0 %v510
        %744 = vmatprep.subr.bf16.mxu0 %v513
        %745 = vmatpush1.bf16.msra.mxu0 %v512
        %746 = vmatprep.subr.bf16.mxu0 %v515
        %747 = vmatpush1.bf16.msra.mxu0 %v514
        %748 = vmatprep.subr.bf16.mxu0 %v517
        %749 = vmatpush1.bf16.msra.mxu0 %v516
        %750 = vmatprep.subr.bf16.mxu0 %v519
        %751 = vmatpush1.bf16.msra.mxu0 %v518
        %752 = vmatprep.subr.bf16.mxu0 %v521
        %753 = vmatpush1.bf16.msra.mxu0 %v520
        %754 = vmatprep.subr.bf16.mxu0 %v523
        %755 = vmatpush1.bf16.msra.mxu0 %v522
        %756 = vmatprep.mubr.bf16.mxu0 %v689
        %757 = vmatmul.mubr.bf16.gmra.mrb[0].mxu0 %v688
        %v758 = vpop.f32.mrb[0].mxu0
        %v759 = vadd.f32 0.0, %v758
        %v760 = vpop.f32.mrb[0].mxu0
        %v761 = vadd.f32 0.0, %v760
        %v762 = vpop.f32.mrb[0].mxu0
        %v763 = vadd.f32 0.0, %v762
        %v764 = vpop.f32.mrb[0].mxu0
        %v765 = vadd.f32 0.0, %v764
        %766 = vmatprep.mubr.bf16.mxu0 %v691
        %767 = vmatmul.mubr.bf16.gmra.mrb[0].mxu0 %v690
        %v768 = vpop.f32.mrb[0].mxu0
        %v769 = vadd.f32 0.0, %v768
        %v770 = vpop.f32.mrb[0].mxu0
        %v771 = vadd.f32 0.0, %v770
        %v772 = vpop.f32.mrb[0].mxu0
        %v773 = vadd.f32 0.0, %v772
        %v774 = vpop.f32.mrb[0].mxu0
        %v775 = vadd.f32 0.0, %v774
        %776 = vmatprep.mubr.bf16.mxu0 %v693
        %777 = vmatmul.mubr.bf16.gmra.mrb[0].mxu0 %v692
        %v778 = vpop.f32.mrb[0].mxu0
        %v779 = vadd.f32 0.0, %v778
        %v780 = vpop.f32.mrb[0].mxu0
        %v781 = vadd.f32 0.0, %v780
        %v782 = vpop.f32.mrb[0].mxu0
        %v783 = vadd.f32 0.0, %v782
        %v784 = vpop.f32.mrb[0].mxu0
        %v785 = vadd.f32 0.0, %v784
        %786 = vmatprep.mubr.bf16.mxu0 %v695
        %787 = vmatmul.mubr.bf16.gmra.mrb[0].mxu0 %v694
        %v788 = vpop.f32.mrb[0].mxu0
        %v789 = vadd.f32 0.0, %v788
        %v790 = vpop.f32.mrb[0].mxu0
        %v791 = vadd.f32 0.0, %v790
        %v792 = vpop.f32.mrb[0].mxu0
        %v793 = vadd.f32 0.0, %v792
        %v794 = vpop.f32.mrb[0].mxu0
        %v795 = vadd.f32 0.0, %v794
        %796 = vmatprep.mubr.bf16.mxu0 %v697
        %797 = vmatmul.mubr.bf16.gmra.mrb[0].mxu0 %v696
        %v798 = vpop.f32.mrb[0].mxu0
        %v799 = vadd.f32 0.0, %v798
        %v800 = vpop.f32.mrb[0].mxu0
        %v801 = vadd.f32 0.0, %v800
        %v802 = vpop.f32.mrb[0].mxu0
        %v803 = vadd.f32 0.0, %v802
        %v804 = vpop.f32.mrb[0].mxu0
        %v805 = vadd.f32 0.0, %v804
        %806 = vmatprep.mubr.bf16.mxu0 %v699
        %807 = vmatmul.mubr.bf16.gmra.mrb[0].mxu0 %v698
        %v808 = vpop.f32.mrb[0].mxu0
        %v809 = vadd.f32 0.0, %v808
        %v810 = vpop.f32.mrb[0].mxu0
        %v811 = vadd.f32 0.0, %v810
        %v812 = vpop.f32.mrb[0].mxu0
        %v813 = vadd.f32 0.0, %v812
        %v814 = vpop.f32.mrb[0].mxu0
        %v815 = vadd.f32 0.0, %v814
        %816 = vmatprep.mubr.bf16.mxu0 %v701
        %817 = vmatmul.mubr.bf16.gmra.mrb[0].mxu0 %v700
        %v818 = vpop.f32.mrb[0].mxu0
        %v819 = vadd.f32 0.0, %v818
        %v820 = vpop.f32.mrb[0].mxu0
        %v821 = vadd.f32 0.0, %v820
        %v822 = vpop.f32.mrb[0].mxu0
        %v823 = vadd.f32 0.0, %v822
        %v824 = vpop.f32.mrb[0].mxu0
        %v825 = vadd.f32 0.0, %v824
        %826 = vmatprep.mubr.bf16.mxu0 %v703
        %827 = vmatmul.mubr.bf16.gmra.mrb[0].mxu0 %v702
        %v828 = vpop.f32.mrb[0].mxu0
        %v829 = vadd.f32 0.0, %v828
        %v830 = vpop.f32.mrb[0].mxu0
        %v831 = vadd.f32 0.0, %v830
        %v832 = vpop.f32.mrb[0].mxu0
        %v833 = vadd.f32 0.0, %v832
        %v834 = vpop.f32.mrb[0].mxu0
        %v835 = vadd.f32 0.0, %v834
        %836 = vmatprep.mubr.bf16.mxu0 %v705
        %837 = vmatmul.mubr.bf16.gmra.mrb[0].mxu0 %v704
        %v838 = vpop.f32.mrb[0].mxu0
        %v839 = vadd.f32 0.0, %v838
        %v840 = vpop.f32.mrb[0].mxu0
        %v841 = vadd.f32 0.0, %v840
        %v842 = vpop.f32.mrb[0].mxu0
        %v843 = vpop.f32.mrb[0].mxu0
        %844 = vdwg.mxu0
        %v845 = vld [vmem:[#allocation8] sm:$0xff]
        %v846 = vld [vmem:[#allocation8 + $0x8] sm:$0xff]
        %v847 = vld [vmem:[#allocation8 + $0x10] sm:$0xff]
        %v848 = vld [vmem:[#allocation8 + $0x18] sm:$0xff]
        %v849 = vld [vmem:[#allocation8 + $0x20] sm:$0xff]
        %v850 = vld [vmem:[#allocation8 + $0x28] sm:$0xff]
        %v851 = vld [vmem:[#allocation8 + $0x30] sm:$0xff]
        %v852 = vld [vmem:[#allocation8 + $0x38] sm:$0xff]
        %v853 = vld [vmem:[#allocation8 + $0x40] sm:$0xff]
        %v854 = vld [vmem:[#allocation8 + $0x48] sm:$0xff]
        %v855 = vld [vmem:[#allocation8 + $0x50] sm:$0xff]
        %v856 = vld [vmem:[#allocation8 + $0x58] sm:$0xff]
        %v857 = vld [vmem:[#allocation8 + $0x60] sm:$0xff]
        %v858 = vld [vmem:[#allocation8 + $0x68] sm:$0xff]
        %v859 = vld [vmem:[#allocation8 + $0x70] sm:$0xff]
        %v860 = vld [vmem:[#allocation8 + $0x78] sm:$0xff]
        %v861 = vld [vmem:[#allocation8 + $0x80] sm:$0xff]
        %v879 = vunpack.c.l.b16 %v845
        %v880 = vunpack.c.h.b16 %v845
        %v881 = vunpack.c.l.b16 %v846
        %v882 = vunpack.c.h.b16 %v846
        %v883 = vunpack.c.l.b16 %v847
        %v884 = vunpack.c.h.b16 %v847
        %v885 = vunpack.c.l.b16 %v848
        %v886 = vunpack.c.h.b16 %v848
        %v887 = vunpack.c.l.b16 %v849
        %v888 = vunpack.c.h.b16 %v849
        %v889 = vunpack.c.l.b16 %v850
        %v890 = vunpack.c.h.b16 %v850
        %v891 = vunpack.c.l.b16 %v851
        %v892 = vunpack.c.h.b16 %v851
        %v893 = vunpack.c.l.b16 %v852
        %v894 = vunpack.c.h.b16 %v852
        %v895 = vunpack.c.l.b16 %v853
        %v896 = vunpack.c.h.b16 %v853
        %v897 = vunpack.c.l.b16 %v854
        %v898 = vunpack.c.h.b16 %v854
        %v899 = vunpack.c.l.b16 %v855
        %v900 = vunpack.c.h.b16 %v855
        %v901 = vunpack.c.l.b16 %v856
        %v902 = vunpack.c.h.b16 %v856
        %v903 = vunpack.c.l.b16 %v857
        %v904 = vunpack.c.h.b16 %v857
        %v905 = vunpack.c.l.b16 %v858
        %v906 = vunpack.c.h.b16 %v858
        %v907 = vunpack.c.l.b16 %v859
        %v908 = vunpack.c.h.b16 %v859
        %v909 = vunpack.c.l.b16 %v860
        %v910 = vunpack.c.h.b16 %v860
        %v911 = vunpack.c.l.b16 %v861
        %v912 = vunpack.c.h.b16 %v861
        %v913 = vpack.c.b16 %v881, %v879
        %v914 = vpack.c.b16 %v882, %v880
        %v915 = vpack.c.b16 %v885, %v883
        %v916 = vpack.c.b16 %v886, %v884
        %v917 = vpack.c.b16 %v889, %v887
        %v918 = vpack.c.b16 %v890, %v888
        %v919 = vpack.c.b16 %v893, %v891
        %v920 = vpack.c.b16 %v894, %v892
        %v921 = vpack.c.b16 %v897, %v895
        %v922 = vpack.c.b16 %v898, %v896
        %v923 = vpack.c.b16 %v901, %v899
        %v924 = vpack.c.b16 %v902, %v900
        %v925 = vpack.c.b16 %v905, %v903
        %v926 = vpack.c.b16 %v906, %v904
        %v927 = vpack.c.b16 %v909, %v907
        %v928 = vpack.c.b16 %v910, %v908
        %v929 = vpack.c.b16 %v911, %v911
        %v930 = vpack.c.b16 %v912, %v912
        %949 = vmatprep.subr.bf16.mxu0 %v589
        %950 = vmatpush1.bf16.msra.mxu0 %v588
        %951 = vmatprep.subr.bf16.mxu0 %v591
        %952 = vmatpush1.bf16.msra.mxu0 %v590
        %953 = vmatprep.subr.bf16.mxu0 %v593
        %954 = vmatpush1.bf16.msra.mxu0 %v592
        %955 = vmatprep.subr.bf16.mxu0 %v595
        %956 = vmatpush1.bf16.msra.mxu0 %v594
        %957 = vmatprep.subr.bf16.mxu0 %v597
        %958 = vmatpush1.bf16.msra.mxu0 %v596
        %959 = vmatprep.subr.bf16.mxu0 %v599
        %960 = vmatpush1.bf16.msra.mxu0 %v598
        %961 = vmatprep.subr.bf16.mxu0 %v601
        %962 = vmatpush1.bf16.msra.mxu0 %v600
        %963 = vmatprep.subr.bf16.mxu0 %v603
        %964 = vmatpush1.bf16.msra.mxu0 %v602
        %965 = vmatprep.subr.bf16.mxu0 %v605
        %966 = vmatpush1.bf16.msra.mxu0 %v604
        %967 = vmatprep.subr.bf16.mxu0 %v607
        %968 = vmatpush1.bf16.msra.mxu0 %v606
        %969 = vmatprep.subr.bf16.mxu0 %v609
        %970 = vmatpush1.bf16.msra.mxu0 %v608
        %971 = vmatprep.subr.bf16.mxu0 %v611
        %972 = vmatpush1.bf16.msra.mxu0 %v610
        %973 = vmatprep.subr.bf16.mxu0 %v613
        %974 = vmatpush1.bf16.msra.mxu0 %v612
        %975 = vmatprep.subr.bf16.mxu0 %v615
        %976 = vmatpush1.bf16.msra.mxu0 %v614
        %977 = vmatprep.subr.bf16.mxu0 %v617
        %978 = vmatpush1.bf16.msra.mxu0 %v616
        %979 = vmatprep.subr.bf16.mxu0 %v619
        %980 = vmatpush1.bf16.msra.mxu0 %v618
        %981 = vmatprep.mubr.bf16.mxu0 %v914
        %982 = vmatmul.mubr.bf16.gmra.mrb[0].mxu0 %v913
        %v983 = vpop.f32.mrb[0].mxu0
        %v984 = vadd.f32 0.0, %v983
        %v985 = vpop.f32.mrb[0].mxu0
        %v986 = vadd.f32 0.0, %v985
        %v987 = vpop.f32.mrb[0].mxu0
        %v988 = vadd.f32 0.0, %v987
        %v989 = vpop.f32.mrb[0].mxu0
        %v990 = vadd.f32 0.0, %v989
        %991 = vmatprep.mubr.bf16.mxu0 %v916
        %992 = vmatmul.mubr.bf16.gmra.mrb[0].mxu0 %v915
        %v993 = vpop.f32.mrb[0].mxu0
        %v994 = vadd.f32 0.0, %v993
        %v995 = vpop.f32.mrb[0].mxu0
        %v996 = vadd.f32 0.0, %v995
        %v997 = vpop.f32.mrb[0].mxu0
        %v998 = vadd.f32 0.0, %v997
        %v999 = vpop.f32.mrb[0].mxu0
        %v1000 = vadd.f32 0.0, %v999
        %1001 = vmatprep.mubr.bf16.mxu0 %v918
        %1002 = vmatmul.mubr.bf16.gmra.mrb[0].mxu0 %v917
        %v1003 = vpop.f32.mrb[0].mxu0
        %v1004 = vadd.f32 0.0, %v1003
        %v1005 = vpop.f32.mrb[0].mxu0
        %v1006 = vadd.f32 0.0, %v1005
        %v1007 = vpop.f32.mrb[0].mxu0
        %v1008 = vadd.f32 0.0, %v1007
        %v1009 = vpop.f32.mrb[0].mxu0
        %v1010 = vadd.f32 0.0, %v1009
        %1011 = vmatprep.mubr.bf16.mxu0 %v920
        %1012 = vmatmul.mubr.bf16.gmra.mrb[0].mxu0 %v919
        %v1013 = vpop.f32.mrb[0].mxu0
        %v1014 = vadd.f32 0.0, %v1013
        %v1015 = vpop.f32.mrb[0].mxu0
        %v1016 = vadd.f32 0.0, %v1015
        %v1017 = vpop.f32.mrb[0].mxu0
        %v1018 = vadd.f32 0.0, %v1017
        %v1019 = vpop.f32.mrb[0].mxu0
        %v1020 = vadd.f32 0.0, %v1019
        %1021 = vmatprep.mubr.bf16.mxu0 %v922
        %1022 = vmatmul.mubr.bf16.gmra.mrb[0].mxu0 %v921
        %v1023 = vpop.f32.mrb[0].mxu0
        %v1024 = vadd.f32 0.0, %v1023
        %v1025 = vpop.f32.mrb[0].mxu0
        %v1026 = vadd.f32 0.0, %v1025
        %v1027 = vpop.f32.mrb[0].mxu0
        %v1028 = vadd.f32 0.0, %v1027
        %v1029 = vpop.f32.mrb[0].mxu0
        %v1030 = vadd.f32 0.0, %v1029
        %1031 = vmatprep.mubr.bf16.mxu0 %v924
        %1032 = vmatmul.mubr.bf16.gmra.mrb[0].mxu0 %v923
        %v1033 = vpop.f32.mrb[0].mxu0
        %v1034 = vadd.f32 0.0, %v1033
        %v1035 = vpop.f32.mrb[0].mxu0
        %v1036 = vadd.f32 0.0, %v1035
        %v1037 = vpop.f32.mrb[0].mxu0
        %v1038 = vadd.f32 0.0, %v1037
        %v1039 = vpop.f32.mrb[0].mxu0
        %v1040 = vadd.f32 0.0, %v1039
        %1041 = vmatprep.mubr.bf16.mxu0 %v926
        %1042 = vmatmul.mubr.bf16.gmra.mrb[0].mxu0 %v925
        %v1043 = vpop.f32.mrb[0].mxu0
        %v1044 = vadd.f32 0.0, %v1043
        %v1045 = vpop.f32.mrb[0].mxu0
        %v1046 = vadd.f32 0.0, %v1045
        %v1047 = vpop.f32.mrb[0].mxu0
        %v1048 = vadd.f32 0.0, %v1047
        %v1049 = vpop.f32.mrb[0].mxu0
        %v1050 = vadd.f32 0.0, %v1049
        %1051 = vmatprep.mubr.bf16.mxu0 %v928
        %1052 = vmatmul.mubr.bf16.gmra.mrb[0].mxu0 %v927
        %v1053 = vpop.f32.mrb[0].mxu0
        %v1054 = vadd.f32 0.0, %v1053
        %v1055 = vpop.f32.mrb[0].mxu0
        %v1056 = vadd.f32 0.0, %v1055
        %v1057 = vpop.f32.mrb[0].mxu0
        %v1058 = vadd.f32 0.0, %v1057
        %v1059 = vpop.f32.mrb[0].mxu0
        %v1060 = vadd.f32 0.0, %v1059
        %1061 = vmatprep.mubr.bf16.mxu0 %v930
        %1062 = vmatmul.mubr.bf16.gmra.mrb[0].mxu0 %v929
        %v1063 = vpop.f32.mrb[0].mxu0
        %v1064 = vadd.f32 0.0, %v1063
        %v1065 = vpop.f32.mrb[0].mxu0
        %v1066 = vadd.f32 0.0, %v1065
        %v1067 = vpop.f32.mrb[0].mxu0
        %v1068 = vpop.f32.mrb[0].mxu0
        %1069 = vdwg.mxu0
        %s1070 = sld [smem:[#allocation2]]
        %v1071 = vstv %s1070
        %v1072 = vadd.f32 %v839, %v1071
        %v1073 = vadd.f32 %v841, %v1071
        %s1074 = sld [smem:[#allocation2 + $0x1]]
        %v1075 = vstv %s1074
        %v1076 = vadd.f32 %v1064, %v1075
        %v1077 = vadd.f32 %v1066, %v1075
        %v1078 = vmax.f32 %v1072, %v1076
        %v1079 = vmax.f32 %v1073, %v1077
        %v1080 = vsub.f32 %v1072, %v1078
        %v1081 = vsub.f32 %v1073, %v1079
        %v1082 = vmul.f32 %v1080, 1.442695
        %v1083 = vpow.pop %v1082
        %v1084 = vmul.f32 %v1081, 1.442695
        %v1085 = vpow.pop %v1084
        %v1086 = vsub.f32 %v1076, %v1078
        %v1087 = vsub.f32 %v1077, %v1079
        %v1088 = vmul.f32 %v1086, 1.442695
        %v1089 = vpow.pop %v1088
        %v1090 = vmul.f32 %v1087, 1.442695
        %v1091 = vpow.pop %v1090
        %v1092 = vadd.f32 %v1083, %v1089
        %v1093 = vadd.f32 %v1085, %v1091
        %v1094 = vrcp.pop %v1092
        %v1095 = vrcp.pop %v1093
        %v1096 = vmul.f32 %v1083, %v1094
        %v1097 = vmul.f32 %v1085, %v1095
        %v1098 = vmul.f32 %v1089, %v1094
        %v1099 = vmul.f32 %v1091, %v1095
        %v1100 = vlaneseq
        %v1101 = vshrl.u32 %v1100, 7
        %v1102 = vsub.s32 0, %v1101
        %v1103 = vrot.slane %v1096, %v1102
        %v1104 = vlaneseq
        %v1105 = vshrl.u32 %v1104, 7
        %v1106 = vsub.s32 0, %v1105
        %v1107 = vrot.slane %v1097, %v1106
        %v1108 = vmul.f32 %v1103, %v759
        %v1109 = vmul.f32 %v1107, %v761
        %v1110 = vmul.f32 %v1103, %v763
        %v1111 = vmul.f32 %v1107, %v765
        %v1112 = vmul.f32 %v1103, %v769
        %v1113 = vmul.f32 %v1107, %v771
        %v1114 = vmul.f32 %v1103, %v773
        %v1115 = vmul.f32 %v1107, %v775
        %v1116 = vmul.f32 %v1103, %v779
        %v1117 = vmul.f32 %v1107, %v781
        %v1118 = vmul.f32 %v1103, %v783
        %v1119 = vmul.f32 %v1107, %v785
        %v1120 = vmul.f32 %v1103, %v789
        %v1121 = vmul.f32 %v1107, %v791
        %v1122 = vmul.f32 %v1103, %v793
        %v1123 = vmul.f32 %v1107, %v795
        %v1124 = vmul.f32 %v1103, %v799
        %v1125 = vmul.f32 %v1107, %v801
        %v1126 = vmul.f32 %v1103, %v803
        %v1127 = vmul.f32 %v1107, %v805
        %v1128 = vmul.f32 %v1103, %v809
        %v1129 = vmul.f32 %v1107, %v811
        %v1130 = vmul.f32 %v1103, %v813
        %v1131 = vmul.f32 %v1107, %v815
        %v1132 = vmul.f32 %v1103, %v819
        %v1133 = vmul.f32 %v1107, %v821
        %v1134 = vmul.f32 %v1103, %v823
        %v1135 = vmul.f32 %v1107, %v825
        %v1136 = vmul.f32 %v1103, %v829
        %v1137 = vmul.f32 %v1107, %v831
        %v1138 = vmul.f32 %v1103, %v833
        %v1139 = vmul.f32 %v1107, %v835
        %v1140 = vlaneseq
        %v1141 = vshrl.u32 %v1140, 7
        %v1142 = vsub.s32 0, %v1141
        %v1143 = vrot.slane %v1098, %v1142
        %v1144 = vlaneseq
        %v1145 = vshrl.u32 %v1144, 7
        %v1146 = vsub.s32 0, %v1145
        %v1147 = vrot.slane %v1099, %v1146
        %v1148 = vmul.f32 %v1143, %v984
        %v1149 = vmul.f32 %v1147, %v986
        %v1150 = vmul.f32 %v1143, %v988
        %v1151 = vmul.f32 %v1147, %v990
        %v1152 = vmul.f32 %v1143, %v994
        %v1153 = vmul.f32 %v1147, %v996
        %v1154 = vmul.f32 %v1143, %v998
        %v1155 = vmul.f32 %v1147, %v1000
        %v1156 = vmul.f32 %v1143, %v1004
        %v1157 = vmul.f32 %v1147, %v1006
        %v1158 = vmul.f32 %v1143, %v1008
        %v1159 = vmul.f32 %v1147, %v1010
        %v1160 = vmul.f32 %v1143, %v1014
        %v1161 = vmul.f32 %v1147, %v1016
        %v1162 = vmul.f32 %v1143, %v1018
        %v1163 = vmul.f32 %v1147, %v1020
        %v1164 = vmul.f32 %v1143, %v1024
        %v1165 = vmul.f32 %v1147, %v1026
        %v1166 = vmul.f32 %v1143, %v1028
        %v1167 = vmul.f32 %v1147, %v1030
        %v1168 = vmul.f32 %v1143, %v1034
        %v1169 = vmul.f32 %v1147, %v1036
        %v1170 = vmul.f32 %v1143, %v1038
        %v1171 = vmul.f32 %v1147, %v1040
        %v1172 = vmul.f32 %v1143, %v1044
        %v1173 = vmul.f32 %v1147, %v1046
        %v1174 = vmul.f32 %v1143, %v1048
        %v1175 = vmul.f32 %v1147, %v1050
        %v1176 = vmul.f32 %v1143, %v1054
        %v1177 = vmul.f32 %v1147, %v1056
        %v1178 = vmul.f32 %v1143, %v1058
        %v1179 = vmul.f32 %v1147, %v1060
        %v1180 = vadd.f32 %v1108, %v1148
        %v1181 = vadd.f32 %v1109, %v1149
        %v1182 = vadd.f32 %v1110, %v1150
        %v1183 = vadd.f32 %v1111, %v1151
        %v1184 = vadd.f32 %v1112, %v1152
        %v1185 = vadd.f32 %v1113, %v1153
        %v1186 = vadd.f32 %v1114, %v1154
        %v1187 = vadd.f32 %v1115, %v1155
        %v1188 = vadd.f32 %v1116, %v1156
        %v1189 = vadd.f32 %v1117, %v1157
        %v1190 = vadd.f32 %v1118, %v1158
        %v1191 = vadd.f32 %v1119, %v1159
        %v1192 = vadd.f32 %v1120, %v1160
        %v1193 = vadd.f32 %v1121, %v1161
        %v1194 = vadd.f32 %v1122, %v1162
        %v1195 = vadd.f32 %v1123, %v1163
        %v1196 = vadd.f32 %v1124, %v1164
        %v1197 = vadd.f32 %v1125, %v1165
        %v1198 = vadd.f32 %v1126, %v1166
        %v1199 = vadd.f32 %v1127, %v1167
        %v1200 = vadd.f32 %v1128, %v1168
        %v1201 = vadd.f32 %v1129, %v1169
        %v1202 = vadd.f32 %v1130, %v1170
        %v1203 = vadd.f32 %v1131, %v1171
        %v1204 = vadd.f32 %v1132, %v1172
        %v1205 = vadd.f32 %v1133, %v1173
        %v1206 = vadd.f32 %v1134, %v1174
        %v1207 = vadd.f32 %v1135, %v1175
        %v1208 = vadd.f32 %v1136, %v1176
        %v1209 = vadd.f32 %v1137, %v1177
        %v1210 = vadd.f32 %v1138, %v1178
        %v1211 = vadd.f32 %v1139, %v1179
        %v1212 = vld [vmem:[%s5] sm:$0xff]
        %v1213 = vld [vmem:[%s5 + $0x8] sm:$0xff]
        %v1214 = vld [vmem:[%s5 + $0x10] sm:$0xff]
        %v1215 = vld [vmem:[%s5 + $0x18] sm:$0xff]
        %v1216 = vld [vmem:[%s5 + $0x20] sm:$0xff]
        %v1217 = vld [vmem:[%s5 + $0x28] sm:$0xff]
        %v1218 = vld [vmem:[%s5 + $0x30] sm:$0xff]
        %v1219 = vld [vmem:[%s5 + $0x38] sm:$0xff]
        %v1220 = vld [vmem:[%s5 + $0x40] sm:$0xff]
        %v1221 = vld [vmem:[%s5 + $0x48] sm:$0xff]
        %v1222 = vld [vmem:[%s5 + $0x50] sm:$0xff]
        %v1223 = vld [vmem:[%s5 + $0x58] sm:$0xff]
        %v1224 = vld [vmem:[%s5 + $0x60] sm:$0xff]
        %v1225 = vld [vmem:[%s5 + $0x68] sm:$0xff]
        %v1226 = vld [vmem:[%s5 + $0x70] sm:$0xff]
        %v1227 = vld [vmem:[%s5 + $0x78] sm:$0xff]
        %1229 = vset.pattern.permute.xlu0 0
        %1230 = vperm.xlu0 %1229, %v1212
        %v1231 = vpop.permute.xlu0 %1230
        %1234 = vset.pattern.permute.xlu0 0
        %1235 = vperm.xlu0 %1234, %v1213
        %v1236 = vpop.permute.xlu0 %1235
        %1239 = vset.pattern.permute.xlu0 0
        %1240 = vperm.xlu0 %1239, %v1214
        %v1241 = vpop.permute.xlu0 %1240
        %1244 = vset.pattern.permute.xlu0 0
        %1245 = vperm.xlu0 %1244, %v1215
        %v1246 = vpop.permute.xlu0 %1245
        %1249 = vset.pattern.permute.xlu0 0
        %1250 = vperm.xlu0 %1249, %v1216
        %v1251 = vpop.permute.xlu0 %1250
        %1254 = vset.pattern.permute.xlu0 0
        %1255 = vperm.xlu0 %1254, %v1217
        %v1256 = vpop.permute.xlu0 %1255
        %1259 = vset.pattern.permute.xlu0 0
        %1260 = vperm.xlu0 %1259, %v1218
        %v1261 = vpop.permute.xlu0 %1260
        %1264 = vset.pattern.permute.xlu0 0
        %1265 = vperm.xlu0 %1264, %v1219
        %v1266 = vpop.permute.xlu0 %1265
        %1269 = vset.pattern.permute.xlu0 0
        %1270 = vperm.xlu0 %1269, %v1220
        %v1271 = vpop.permute.xlu0 %1270
        %1274 = vset.pattern.permute.xlu0 0
        %1275 = vperm.xlu0 %1274, %v1221
        %v1276 = vpop.permute.xlu0 %1275
        %1279 = vset.pattern.permute.xlu0 0
        %1280 = vperm.xlu0 %1279, %v1222
        %v1281 = vpop.permute.xlu0 %1280
        %1284 = vset.pattern.permute.xlu0 0
        %1285 = vperm.xlu0 %1284, %v1223
        %v1286 = vpop.permute.xlu0 %1285
        %1289 = vset.pattern.permute.xlu0 0
        %1290 = vperm.xlu0 %1289, %v1224
        %v1291 = vpop.permute.xlu0 %1290
        %1294 = vset.pattern.permute.xlu0 0
        %1295 = vperm.xlu0 %1294, %v1225
        %v1296 = vpop.permute.xlu0 %1295
        %1299 = vset.pattern.permute.xlu0 0
        %1300 = vperm.xlu0 %1299, %v1226
        %v1301 = vpop.permute.xlu0 %1300
        %1304 = vset.pattern.permute.xlu0 0
        %1305 = vperm.xlu0 %1304, %v1227
        %v1306 = vpop.permute.xlu0 %1305
        %v1308 = vadd.f32 %v1180, %v1231
        %v1309 = vadd.f32 %v1181, %v1231
        %v1310 = vadd.f32 %v1182, %v1236
        %v1311 = vadd.f32 %v1183, %v1236
        %v1312 = vadd.f32 %v1184, %v1241
        %v1313 = vadd.f32 %v1185, %v1241
        %v1314 = vadd.f32 %v1186, %v1246
        %v1315 = vadd.f32 %v1187, %v1246
        %v1316 = vadd.f32 %v1188, %v1251
        %v1317 = vadd.f32 %v1189, %v1251
        %v1318 = vadd.f32 %v1190, %v1256
        %v1319 = vadd.f32 %v1191, %v1256
        %v1320 = vadd.f32 %v1192, %v1261
        %v1321 = vadd.f32 %v1193, %v1261
        %v1322 = vadd.f32 %v1194, %v1266
        %v1323 = vadd.f32 %v1195, %v1266
        %v1324 = vadd.f32 %v1196, %v1271
        %v1325 = vadd.f32 %v1197, %v1271
        %v1326 = vadd.f32 %v1198, %v1276
        %v1327 = vadd.f32 %v1199, %v1276
        %v1328 = vadd.f32 %v1200, %v1281
        %v1329 = vadd.f32 %v1201, %v1281
        %v1330 = vadd.f32 %v1202, %v1286
        %v1331 = vadd.f32 %v1203, %v1286
        %v1332 = vadd.f32 %v1204, %v1291
        %v1333 = vadd.f32 %v1205, %v1291
        %v1334 = vadd.f32 %v1206, %v1296
        %v1335 = vadd.f32 %v1207, %v1296
        %v1336 = vadd.f32 %v1208, %v1301
        %v1337 = vadd.f32 %v1209, %v1301
        %v1338 = vadd.f32 %v1210, %v1306
        %v1339 = vadd.f32 %v1211, %v1306
        %v1340 = vmax.f32 %v1308, 0.0
        %v1341 = vmax.f32 %v1309, 0.0
        %v1342 = vmax.f32 %v1310, 0.0
        %v1343 = vmax.f32 %v1311, 0.0
        %v1344 = vmax.f32 %v1312, 0.0
        %v1345 = vmax.f32 %v1313, 0.0
        %v1346 = vmax.f32 %v1314, 0.0
        %v1347 = vmax.f32 %v1315, 0.0
        %v1348 = vmax.f32 %v1316, 0.0
        %v1349 = vmax.f32 %v1317, 0.0
        %v1350 = vmax.f32 %v1318, 0.0
        %v1351 = vmax.f32 %v1319, 0.0
        %v1352 = vmax.f32 %v1320, 0.0
        %v1353 = vmax.f32 %v1321, 0.0
        %v1354 = vmax.f32 %v1322, 0.0
        %v1355 = vmax.f32 %v1323, 0.0
        %v1356 = vmax.f32 %v1324, 0.0
        %v1357 = vmax.f32 %v1325, 0.0
        %v1358 = vmax.f32 %v1326, 0.0
        %v1359 = vmax.f32 %v1327, 0.0
        %v1360 = vmax.f32 %v1328, 0.0
        %v1361 = vmax.f32 %v1329, 0.0
        %v1362 = vmax.f32 %v1330, 0.0
        %v1363 = vmax.f32 %v1331, 0.0
        %v1364 = vmax.f32 %v1332, 0.0
        %v1365 = vmax.f32 %v1333, 0.0
        %v1366 = vmax.f32 %v1334, 0.0
        %v1367 = vmax.f32 %v1335, 0.0
        %v1368 = vmax.f32 %v1336, 0.0
        %v1369 = vmax.f32 %v1337, 0.0
        %v1370 = vmax.f32 %v1338, 0.0
        %v1371 = vmax.f32 %v1339, 0.0
        %v1372 = vld [vmem:[%s6] sm:$0xf]
        %v1373 = vpack.c.bf16 %v1342, %v1340
        %v1374 = vpack.c.bf16 %v1343, %v1341
        %v1375 = vpack.c.bf16 %v1346, %v1344
        %v1376 = vpack.c.bf16 %v1347, %v1345
        %v1377 = vpack.c.bf16 %v1350, %v1348
        %v1378 = vpack.c.bf16 %v1351, %v1349
        %v1379 = vpack.c.bf16 %v1354, %v1352
        %v1380 = vpack.c.bf16 %v1355, %v1353
        %v1381 = vpack.c.bf16 %v1358, %v1356
        %v1382 = vpack.c.bf16 %v1359, %v1357
        %v1383 = vpack.c.bf16 %v1362, %v1360
        %v1384 = vpack.c.bf16 %v1363, %v1361
        %v1385 = vpack.c.bf16 %v1366, %v1364
        %v1386 = vpack.c.bf16 %v1367, %v1365
        %v1387 = vpack.c.bf16 %v1370, %v1368
        %v1388 = vpack.c.bf16 %v1371, %v1369
        %v1389 = vld [vmem:[%s7] sm:$0x7f]
        %1391 = vset.pattern.permute.xlu0 0
        %1392 = vperm.xlu0 %1391, %v1389
        %v1393 = vpop.permute.xlu0 %1392
        %1395 = vmatprep.subr.bf16.mxu0 %v1374
        %1396 = vmatpush1.bf16.msra.mxu0 %v1373
        %1397 = vmatprep.subr.bf16.mxu0 %v1376
        %1398 = vmatpush1.bf16.msra.mxu0 %v1375
        %1399 = vmatprep.subr.bf16.mxu0 %v1378
        %1400 = vmatpush1.bf16.msra.mxu0 %v1377
        %1401 = vmatprep.subr.bf16.mxu0 %v1380
        %1402 = vmatpush1.bf16.msra.mxu0 %v1379
        %1403 = vmatprep.subr.bf16.mxu0 %v1382
        %1404 = vmatpush1.bf16.msra.mxu0 %v1381
        %1405 = vmatprep.subr.bf16.mxu0 %v1384
        %1406 = vmatpush1.bf16.msra.mxu0 %v1383
        %1407 = vmatprep.subr.bf16.mxu0 %v1386
        %1408 = vmatpush1.bf16.msra.mxu0 %v1385
        %1409 = vmatprep.subr.bf16.mxu0 %v1388
        %1410 = vmatpush1.bf16.msra.mxu0 %v1387
        %1411 = vmatprep.subr.bf16.mxu0 0
        %1412 = vmatpush1.bf16.msra.mxu0 0
        %1413 = vmatprep.subr.bf16.mxu0 0
        %1414 = vmatpush1.bf16.msra.mxu0 0
        %1415 = vmatprep.subr.bf16.mxu0 0
        %1416 = vmatpush1.bf16.msra.mxu0 0
        %1417 = vmatprep.subr.bf16.mxu0 0
        %1418 = vmatpush1.bf16.msra.mxu0 0
        %1419 = vmatprep.subr.bf16.mxu0 0
        %1420 = vmatpush1.bf16.msra.mxu0 0
        %1421 = vmatprep.subr.bf16.mxu0 0
        %1422 = vmatpush1.bf16.msra.mxu0 0
        %1423 = vmatprep.subr.bf16.mxu0 0
        %1424 = vmatpush1.bf16.msra.mxu0 0
        %1425 = vmatprep.subr.bf16.mxu0 0
        %1426 = vmatpush1.bf16.msra.mxu0 0
        %1427 = vmatprep.mubr.bf16.mxu0 0
        %1428 = vmatmul.mubr.bf16.gmra.mrb[0].mxu0 %v1372
        %v1429 = vpop.f32.mrb[0].mxu0
        %v1430 = vadd.f32 %v1393, %v1429
        %v1431 = vpop.f32.mrb[0].mxu0
        %v1432 = vadd.f32 %v1393, %v1431
        %v1433 = vpop.f32.mrb[0].mxu0
        %v1434 = vpop.f32.mrb[0].mxu0
        %1435 = vdwg.mxu0
        %1436 = vst [vmem:[%s425] sm:$0x7f] %v1430
        %1437 = vst [vmem:[%s425 + $0x8] sm:$0x7f] %v1432
        %s1438 = smul.u32 2, %s31
        %p1439 = scmp.lt.s32.totalorder %s30, 1
        %s1440 = scalar_select %p1439, %s30, 1
        %p1441 = scmp.lt.s32.totalorder %s1438, 1
        %s1442 = scalar_select %p1441, %s1438, 1
        %s1443 = smul.addr %s1440, 2
        %s1444 = sadd.s32 %s1442, %s1443
        %s1445 = smul.addr %s1444, 8
        %s1446 = scalar_lea.vmem %s8, %s1445
        // Predicated region
        $region69: #{tpu_custom_call.1} parent=51 // pred_check
          %p1447 = pneg %p240
        $region70: #{tpu_custom_call.1} parent=51 // pred_check_branch
          %1449 = sbr.rel (%p1447) target = $region72
        $region71: #{tpu_custom_call.1} parent=51 // pred_region
          %s1450 = smul.u32 2, %s31
        $region72: #{tpu_custom_call.1} parent=51 // pred_fallthru
          _
      $region52: #{tpu_custom_call.1} parent=5 // pred_fallthru
        _
      %p1451 = scmp.le.s32.totalorder 2, %s21
      // Predicated region
      $region73: #{tpu_custom_call.1} parent=5 // pred_check
        %p1452 = pneg %p1451
      $region74: #{tpu_custom_call.1} parent=5 // pred_check_branch
        %1454 = sbr.rel (%p1452) target = $region76
      $region75: #{tpu_custom_call.1} parent=5 // pred_region
        %s1455 = ssub.s32 %s21, 2
        // Predicated region
        $region77: #{tpu_custom_call.1} parent=75 // pred_check
          %p1456 = pneg %p246
        $region78: #{tpu_custom_call.1} parent=75 // pred_check_branch
          %1458 = sbr.rel (%p1456) target = $region80
        $region79: #{tpu_custom_call.1} parent=75 // pred_region
          %s1459 = smul.u32 2, %s33
          %p1460 = scmp.lt.s32.totalorder %s32, 1
          %s1461 = scalar_select %p1460, %s32, 1
          %p1462 = scmp.lt.s32.totalorder %s1459, 1
          %s1463 = scalar_select %p1462, %s1459, 1
          %s1464 = smul.addr %s1461, 2
          %s1465 = sadd.s32 %s1463, %s1464
          %s1466 = smul.addr %s1465, 8
          %s1467 = scalar_lea.vmem %s8, %s1466
        $region80: #{tpu_custom_call.1} parent=75 // pred_fallthru
          _
      $region76: #{tpu_custom_call.1} parent=5 // pred_fallthru
        _
    $region6: #{tpu_custom_call.1} parent=1 // loop_footer
      %s25 = sadd.s32 1, %s21
    $region7: #{tpu_custom_call.1} parent=1 // loop_footer_branch
      %20 = sbr.rel target = $region3
    $region8: #{tpu_custom_call.1} parent=1 // loop_exit
      _
    %1468 = vsyncpa [#allocation3], 1
    %s1469 = scalar_lea.sflag [#allocation3], 1
    %1470 = vsyncpa %s1469, 1
    %1471 = vsyncpa [#allocation7], 1
    %s1472 = scalar_lea.sflag [#allocation7], 1
    %1473 = vsyncpa %s1472, 1
    %1474 = vsyncpa [#allocation4], 1
    %s1475 = scalar_lea.sflag [#allocation4], 1
    %1476 = vsyncpa %s1475, 1

</llo_original>
